<compile_context>
chip_gen: v7x
topology: tpu7x:2x2x1
jax: 0.10.0
libtpu: 0.0.40
codegen_flags: <defaults>
</compile_context>

<pallas_src>
import functools
import math

import jax
import jax.numpy as jnp
from jax.experimental import pallas as pl
from jax.experimental.pallas import tpu as pltpu

_EPS = 1e-5
_VMEM_LIMIT_BYTES = 48 * 1024 * 1024


# ------------------------------ Pallas kernels ------------------------------

def _mm_bias_kernel(a_ref, b_ref, bias_ref, o_ref, *, relu):
    # bf16 x bf16 -> f32 on the MXU; BN scale is pre-folded into b, shift=bias.
    acc = jnp.dot(a_ref[...], b_ref[...], preferred_element_type=jnp.float32)
    acc = acc + bias_ref[...]
    if relu:
        acc = jnp.maximum(acc, 0.0)
    o_ref[...] = acc.astype(o_ref.dtype)


def _mm_bias_res_kernel(a_ref, b_ref, bias_ref, res_ref, o_ref, *, relu):
    acc = jnp.dot(a_ref[...], b_ref[...], preferred_element_type=jnp.float32)
    acc = acc + bias_ref[...] + res_ref[...].astype(jnp.float32)
    if relu:
        acc = jnp.maximum(acc, 0.0)
    o_ref[...] = acc.astype(o_ref.dtype)


# ----------------------------- kernel wrappers ------------------------------

def _pick_tile_m(m):
    for t in (512, 256, 128, 64, 32, 16, 8):
        if m % t == 0:
            return t
    return m


def _pick_tile_n(n):
    if n <= 256:
        return n
    for t in (256, 128):
        if n % t == 0:
            return t
    return n


def _fused_matmul(a, b, bias, residual=None, relu=True):
    """(M,K)@(K,N) + bias (+residual) (+ReLU).

    a / b / residual are cast to bf16 for the MXU, accumulation is f32,
    output is f32.  BN scale must already be folded into b; bias = BN shift.
    """
    M, K = a.shape
    Kb, N = b.shape
    assert K == Kb
    a = a.astype(jnp.bfloat16)
    b = b.astype(jnp.bfloat16)
    bias2 = bias.reshape(1, N).astype(jnp.float32)

    tile_m = _pick_tile_m(M)
    tile_n = _pick_tile_n(N)
    grid = (M // tile_m, N // tile_n)

    a_spec = pl.BlockSpec((tile_m, K), lambda i, j: (i, 0))
    b_spec = pl.BlockSpec((K, tile_n), lambda i, j: (0, j))
    v_spec = pl.BlockSpec((1, tile_n), lambda i, j: (0, j))
    o_spec = pl.BlockSpec((tile_m, tile_n), lambda i, j: (i, j))
    cp = pltpu.CompilerParams(
        dimension_semantics=("parallel", "parallel"),
        vmem_limit_bytes=_VMEM_LIMIT_BYTES)

    if residual is None:
        return pl.pallas_call(
            functools.partial(_mm_bias_kernel, relu=relu),
            out_shape=jax.ShapeDtypeStruct((M, N), jnp.float32),
            grid=grid,
            in_specs=[a_spec, b_spec, v_spec],
            out_specs=o_spec,
            compiler_params=cp,
        )(a, b, bias2)

    r_spec = pl.BlockSpec((tile_m, tile_n), lambda i, j: (i, j))
    return pl.pallas_call(
        functools.partial(_mm_bias_res_kernel, relu=relu),
        out_shape=jax.ShapeDtypeStruct((M, N), jnp.float32),
        grid=grid,
        in_specs=[a_spec, b_spec, v_spec, r_spec],
        out_specs=o_spec,
        compiler_params=cp,
    )(a, b, bias2, residual.astype(jnp.bfloat16))


# --------------------------- BN folding / im2col ----------------------------

def _bn_params(c):
    # eval-mode BatchNorm with init gamma=1, beta=0, running_mean=0, running_var=1
    # TODO(synk): training-mode batch statistics / running-stat updates not modeled.
    return (jnp.ones((c,), jnp.float32), jnp.zeros((c,), jnp.float32),
            jnp.zeros((c,), jnp.float32), jnp.ones((c,), jnp.float32))


def _bn_scale_shift(bn):
    gamma, beta, mean, var = bn
    scale = gamma / jnp.sqrt(var + _EPS)
    shift = beta - mean * scale
    return scale, shift


def _fold_bn_mat(w_mat, bn):
    scale, shift = _bn_scale_shift(bn)
    return w_mat * scale[None, :], shift


def _im2col(x, kh, kw, pad_lo, pad_hi):
    """x: (N,H,W,C) -> (N*OH*OW, KH*KW*C) patches for a stride-1 conv."""
    N, H, W, C = x.shape
    xp = jnp.pad(x, ((0, 0), (pad_lo, pad_hi), (pad_lo, pad_hi), (0, 0)))
    oh = H + pad_lo + pad_hi - kh + 1
    ow = W + pad_lo + pad_hi - kw + 1
    cols = []
    for i in range(kh):
        for j in range(kw):
            cols.append(xp[:, i:i + oh, j:j + ow, :])
    patches = jnp.stack(cols, axis=3)              # (N, oh, ow, kh*kw, C)
    return patches.reshape(N * oh * ow, kh * kw * C), oh, ow


# ------------------------- transposed-conv building blocks ------------------

def deconv1x1_bn_act(x, w_t, bn, relu=True, residual=None):
    """ConvTranspose2d(Cin, Cout, 1, bias=False) + BN (+residual) (+ReLU)."""
    N, H, W, Cin = x.shape
    Cout = w_t.shape[1]
    w_mat, shift = _fold_bn_mat(w_t.reshape(Cin, Cout), bn)
    res = None if residual is None else residual.reshape(N * H * W, Cout)
    out = _fused_matmul(x.reshape(N * H * W, Cin), w_mat, shift,
                        residual=res, relu=relu)
    return out.reshape(N, H, W, Cout)


def deconv3x3_bn_act(x, w_t, bn, stride, relu=True):
    """Deconv_Bottleneck: ConvTranspose2d(3x3, stride, padding=1,
    output_padding=1 if stride==2) + BN (+ReLU).  w_t: (Cin, Cout, 3, 3)."""
    assert stride in (1, 2)
    N, H, W, Cin = x.shape
    Cout = w_t.shape[1]
    if stride == 2:
        # zero-dilate the input; a stride-1 conv with the spatially flipped
        # kernel then reproduces the transposed conv exactly.
        z = jnp.zeros((N, 2 * H - 1, 2 * W - 1, Cin), x.dtype)
        xin = z.at[:, ::2, ::2, :].set(x)
        pad_lo, pad_hi = 1, 2          # (k-1-p, k-1-p+output_padding)
    else:
        xin = x
        pad_lo, pad_hi = 1, 1
    patches, oh, ow = _im2col(xin, 3, 3, pad_lo, pad_hi)
    # equivalent forward-conv weight: flip spatially, reorder to (kh,kw,Cin,Cout)
    w_eq = jnp.flip(w_t, axis=(2, 3)).transpose(2, 3, 0, 1).reshape(9 * Cin, Cout)
    w_eq, shift = _fold_bn_mat(w_eq, bn)
    out = _fused_matmul(patches, w_eq, shift, relu=relu)
    return out.reshape(N, oh, ow, Cout)


def downsample_1x1_s2_bn(x, w_t, bn):
    """ConvTranspose2d(Cin, Cout, 1, stride=2, output_padding=1, bias=False)+BN."""
    N, H, W, Cin = x.shape
    Cout = w_t.shape[1]
    w_mat, shift = _fold_bn_mat(w_t.reshape(Cin, Cout), bn)
    vals = _fused_matmul(x.reshape(N * H * W, Cin), w_mat, shift, relu=False)
    vals = vals.reshape(N, H, W, Cout)
    # even output positions carry the conv result; odd positions hold bn(0)=shift.
    out = jnp.zeros((N, 2 * H, 2 * W, Cout), jnp.float32) + shift.reshape(1, 1, 1, Cout)
    return out.at[:, ::2, ::2, :].set(vals)


# ------------------------------ DeBottleneck --------------------------------

def init_debottleneck(key, inplanes, planes, outplanes, stride=1):
    ks = jax.random.split(key, 4)

    def w(k, cin, cout, kh, kw):          # ConvTranspose2d weight layout (Cin,Cout,kh,kw)
        std = math.sqrt(2.0 / (cout * kh * kw))
        return jax.random.normal(k, (cin, cout, kh, kw), jnp.float32) * std

    p = {"stride": stride,
         "w1": w(ks[0], inplanes, planes, 1, 1), "bn1": _bn_params(planes),
         "w2": w(ks[1], planes, planes, 3, 3),   "bn2": _bn_params(planes),
         "w3": w(ks[2], planes, outplanes, 1, 1), "bn3": _bn_params(outplanes)}
    if stride != 1 or inplanes != outplanes:
        # downsample = ConvTranspose2d(1x1, stride, output_padding=stride-1) + BN
        p["wd"] = w(ks[3], inplanes, outplanes, 1, 1)
        p["bnd"] = _bn_params(outplanes)
    return p


def debottleneck_forward(x_nchw, params):
    s = params["stride"]
    x = jnp.transpose(x_nchw, (0, 2, 3, 1)).astype(jnp.float32)   # NCHW -> NHWC
    out = deconv1x1_bn_act(x, params["w1"], params["bn1"], relu=True)
    out = deconv3x3_bn_act(out, params["w2"], params["bn2"], stride=s, relu=True)
    if "wd" in params:
        if s == 2:
            residual = downsample_1x1_s2_bn(x, params["wd"], params["bnd"])
        else:
            residual = deconv1x1_bn_act(x, params["wd"], params["bnd"], relu=False)
    else:
        residual = x
    # out = relu(bn3(conv3(out)) + residual), fused into one Pallas call
    out = deconv1x1_bn_act(out, params["w3"], params["bn3"], relu=True,
                           residual=residual)
    return jnp.transpose(out, (0, 3, 1, 2))                        # NHWC -> NCHW


# ----------------------- pure-JAX reference (validation) --------------------

def _q(a):
    # mimic the kernel's bf16 operand rounding (accumulation stays f32)
    return a.astype(jnp.bfloat16).astype(jnp.float32)


def _ref_deconv_transpose(x, w_t, stride, padding, output_padding):
    """Literal ConvTranspose2d (scatter-add definition). x NHWC, w (Cin,Cout,kh,kw)."""
    N, H, W, Cin = x.shape
    _, Cout, KH, KW = w_t.shape
    OH = (H - 1) * stride - 2 * padding + KH + output_padding
    OW = (W - 1) * stride - 2 * padding + KW + output_padding
    buf = jnp.zeros((N, (H - 1) * stride + KH + output_padding,
                        (W - 1) * stride + KW + output_padding, Cout), jnp.float32)
    for kh in range(KH):
        for kw in range(KW):
            contrib = jnp.einsum('nhwc,cd->nhwd', x, w_t[:, :, kh, kw])
            buf = buf.at[:, kh:kh + (H - 1) * stride + 1:stride,
                            kw:kw + (W - 1) * stride + 1:stride, :].add(contrib)
    return buf[:, padding:padding + OH, padding:padding + OW, :]


def _ref_block(inp, w_t, bn, stride, padding, output_padding, relu, residual=None):
    scale, shift = _bn_scale_shift(bn)
    wf = w_t * scale[None, :, None, None]
    out = _ref_deconv_transpose(_q(inp), _q(wf), stride, padding, output_padding)
    out = out + shift.reshape(1, 1, 1, -1)
    if residual is not None:
        out = out + _q(residual)
    if relu:
        out = jnp.maximum(out, 0.0)
    return out


def ref_forward(x_nchw, params):
    s = params["stride"]
    x = jnp.transpose(x_nchw, (0, 2, 3, 1)).astype(jnp.float32)
    out = _ref_block(x, params["w1"], params["bn1"], 1, 0, 0, True)
    out = _ref_block(out, params["w2"], params["bn2"], s, 1, s - 1, True)
    if "wd" in params:
        res = _ref_block(x, params["wd"], params["bnd"], s, 0, s - 1, False)
    else:
        res = x
    out = _ref_block(out, params["w3"], params["bn3"], 1, 0, 0, True, residual=res)
    return jnp.transpose(out, (0, 3, 1, 2))


# ----------------------------------- main -----------------------------------

if __name__ == "__main__":
    root = jax.random.PRNGKey(0)
    kp, kx = jax.random.split(root)
    kA, kB = jax.random.split(kp)

    # Block A: stride=1, downsample=None (residual = x), inplanes == outplanes.
    pA = init_debottleneck(kA, inplanes=32, planes=8, outplanes=32, stride=1)
    # Block B: stride=2 upsampling block with a 1x1-stride-2 deconv downsample.
    pB = init_debottleneck(kB, inplanes=32, planes=16, outplanes=16, stride=2)

    x = jax.random.normal(kx, (2, 32, 16, 16), jnp.float32)

    fwdA = jax.jit(lambda v: debottleneck_forward(v, pA))
    fwdB = jax.jit(lambda v: debottleneck_forward(v, pB))
    outA = fwdA(x)
    outB = fwdB(x)
    jax.block_until_ready((outA, outB))

    refA = ref_forward(x, pA)
    refB = ref_forward(x, pB)

    assert outA.shape == (2, 32, 16, 16)
    assert outB.shape == (2, 16, 32, 32)
    for o, r in ((outA, refA), (outB, refB)):
        assert bool(jnp.all(jnp.isfinite(o)))
        rel = float(jnp.max(jnp.abs(o - r)) / (jnp.max(jnp.abs(r)) + 1e-6))
        assert rel < 2e-2, rel
    print("KERNEL_OK")
</pallas_src>

<mosaic_0001>
module attributes {stable_mosaic.version = 11 : i64} {
  func.func @_mm_bias_kernel(%arg0: i32, %arg1: i32, %arg2: memref<512x32xbf16, #tpu.memory_space<vmem>>, %arg3: memref<32x8xbf16, #tpu.memory_space<vmem>>, %arg4: memref<1x8xf32, #tpu.memory_space<vmem>>, %arg5: memref<512x8xf32, #tpu.memory_space<vmem>>) attributes {dimension_semantics = [#tpu.dimension_semantics<parallel>, #tpu.dimension_semantics<parallel>], iteration_bounds = array<i64: 1, 1>, scalar_prefetch = 0 : i64, scratch_operands = 0 : i64, tpu.core_type = #tpu.core_type<tc>, window_params = [{transform_indices = @transform_0, window_bounds = array<i64: 512, 32>}, {transform_indices = @transform_1, window_bounds = array<i64: 32, 8>}, {transform_indices = @transform_2, window_bounds = array<i64: 1, 8>}, {transform_indices = @transform_3, window_bounds = array<i64: 512, 8>}]} {
    %c0 = arith.constant 0 : index
    %c0_0 = arith.constant 0 : index
    %0 = vector.load %arg2[%c0, %c0_0] : memref<512x32xbf16, #tpu.memory_space<vmem>>, vector<512x32xbf16>
    %c0_1 = arith.constant 0 : index
    %c0_2 = arith.constant 0 : index
    %1 = vector.load %arg3[%c0_1, %c0_2] : memref<32x8xbf16, #tpu.memory_space<vmem>>, vector<32x8xbf16>
    %cst = arith.constant dense<0.000000e+00> : vector<512x8xf32>
    %2 = tpu.matmul %0, %1, %cst {dimension_numbers = #tpu.dot_dimension_numbers<[1], [0], [0], [1], [0, 0, 1, 1], [], []>} : vector<512x32xbf16>, vector<32x8xbf16>, vector<512x8xf32> -> vector<512x8xf32>
    %c0_3 = arith.constant 0 : index
    %c0_4 = arith.constant 0 : index
    %3 = vector.load %arg4[%c0_3, %c0_4] : memref<1x8xf32, #tpu.memory_space<vmem>>, vector<1x8xf32>
    %4 = vector.broadcast %3 : vector<1x8xf32> to vector<512x8xf32>
    %5 = arith.addf %2, %4 : vector<512x8xf32>
    %cst_5 = arith.constant 0.000000e+00 : f32
    %6 = vector.broadcast %cst_5 : f32 to vector<512x8xf32>
    %7 = arith.maximumf %5, %6 : vector<512x8xf32>
    %c0_6 = arith.constant 0 : index
    %c0_7 = arith.constant 0 : index
    %8 = vector.load %arg5[%c0_6, %c0_7] : memref<512x8xf32, #tpu.memory_space<vmem>>, vector<512x8xf32>
    tpu.vector_store %arg5[%c0_6, %c0_7], %7 {strides = array<i32>} : memref<512x8xf32, #tpu.memory_space<vmem>>, vector<512x8xf32>,
    return
  }
  func.func @transform_0(%arg0: i32, %arg1: i32) -> (i32, i32) {
    %c0_i32 = arith.constant 0 : i32
    %c0_i32_0 = arith.constant 0 : i32
    return %arg0, %c0_i32 : i32, i32
  }
  func.func @transform_1(%arg0: i32, %arg1: i32) -> (i32, i32) {
    %c0_i32 = arith.constant 0 : i32
    %c0_i32_0 = arith.constant 0 : i32
    return %c0_i32, %arg1 : i32, i32
  }
  func.func @transform_2(%arg0: i32, %arg1: i32) -> (i32, i32) {
    %c0_i32 = arith.constant 0 : i32
    %c0_i32_0 = arith.constant 0 : i32
    return %c0_i32, %arg1 : i32, i32
  }
  func.func @transform_3(%arg0: i32, %arg1: i32) -> (i32, i32) {
    %c0_i32 = arith.constant 0 : i32
    return %arg0, %arg1 : i32, i32
  }
}

module attributes {stable_mosaic.version = 11 : i64} {
  func.func @_mm_bias_kernel(%arg0: i32, %arg1: i32, %arg2: memref<512x72xbf16, #tpu.memory_space<vmem>>, %arg3: memref<72x8xbf16, #tpu.memory_space<vmem>>, %arg4: memref<1x8xf32, #tpu.memory_space<vmem>>, %arg5: memref<512x8xf32, #tpu.memory_space<vmem>>) attributes {dimension_semantics = [#tpu.dimension_semantics<parallel>, #tpu.dimension_semantics<parallel>], iteration_bounds = array<i64: 1, 1>, scalar_prefetch = 0 : i64, scratch_operands = 0 : i64, tpu.core_type = #tpu.core_type<tc>, window_params = [{transform_indices = @transform_0, window_bounds = array<i64: 512, 72>}, {transform_indices = @transform_1, window_bounds = array<i64: 72, 8>}, {transform_indices = @transform_2, window_bounds = array<i64: 1, 8>}, {transform_indices = @transform_3, window_bounds = array<i64: 512, 8>}]} {
    %c0 = arith.constant 0 : index
    %c0_0 = arith.constant 0 : index
    %0 = vector.load %arg2[%c0, %c0_0] : memref<512x72xbf16, #tpu.memory_space<vmem>>, vector<512x72xbf16>
    %c0_1 = arith.constant 0 : index
    %c0_2 = arith.constant 0 : index
    %1 = vector.load %arg3[%c0_1, %c0_2] : memref<72x8xbf16, #tpu.memory_space<vmem>>, vector<72x8xbf16>
    %cst = arith.constant dense<0.000000e+00> : vector<512x8xf32>
    %2 = tpu.matmul %0, %1, %cst {dimension_numbers = #tpu.dot_dimension_numbers<[1], [0], [0], [1], [0, 0, 1, 1], [], []>} : vector<512x72xbf16>, vector<72x8xbf16>, vector<512x8xf32> -> vector<512x8xf32>
    %c0_3 = arith.constant 0 : index
    %c0_4 = arith.constant 0 : index
    %3 = vector.load %arg4[%c0_3, %c0_4] : memref<1x8xf32, #tpu.memory_space<vmem>>, vector<1x8xf32>
    %4 = vector.broadcast %3 : vector<1x8xf32> to vector<512x8xf32>
    %5 = arith.addf %2, %4 : vector<512x8xf32>
    %cst_5 = arith.constant 0.000000e+00 : f32
    %6 = vector.broadcast %cst_5 : f32 to vector<512x8xf32>
    %7 = arith.maximumf %5, %6 : vector<512x8xf32>
    %c0_6 = arith.constant 0 : index
    %c0_7 = arith.constant 0 : index
    %8 = vector.load %arg5[%c0_6, %c0_7] : memref<512x8xf32, #tpu.memory_space<vmem>>, vector<512x8xf32>
    tpu.vector_store %arg5[%c0_6, %c0_7], %7 {strides = array<i32>} : memref<512x8xf32, #tpu.memory_space<vmem>>, vector<512x8xf32>,
    return
  }
  func.func @transform_0(%arg0: i32, %arg1: i32) -> (i32, i32) {
    %c0_i32 = arith.constant 0 : i32
    %c0_i32_0 = arith.constant 0 : i32
    return %arg0, %c0_i32 : i32, i32
  }
  func.func @transform_1(%arg0: i32, %arg1: i32) -> (i32, i32) {
    %c0_i32 = arith.constant 0 : i32
    %c0_i32_0 = arith.constant 0 : i32
    return %c0_i32, %arg1 : i32, i32
  }
  func.func @transform_2(%arg0: i32, %arg1: i32) -> (i32, i32) {
    %c0_i32 = arith.constant 0 : i32
    %c0_i32_0 = arith.constant 0 : i32
    return %c0_i32, %arg1 : i32, i32
  }
  func.func @transform_3(%arg0: i32, %arg1: i32) -> (i32, i32) {
    %c0_i32 = arith.constant 0 : i32
    return %arg0, %arg1 : i32, i32
  }
}

module attributes {stable_mosaic.version = 11 : i64} {
  func.func @_mm_bias_res_kernel(%arg0: i32, %arg1: i32, %arg2: memref<512x8xbf16, #tpu.memory_space<vmem>>, %arg3: memref<8x32xbf16, #tpu.memory_space<vmem>>, %arg4: memref<1x32xf32, #tpu.memory_space<vmem>>, %arg5: memref<512x32xbf16, #tpu.memory_space<vmem>>, %arg6: memref<512x32xf32, #tpu.memory_space<vmem>>) attributes {dimension_semantics = [#tpu.dimension_semantics<parallel>, #tpu.dimension_semantics<parallel>], iteration_bounds = array<i64: 1, 1>, scalar_prefetch = 0 : i64, scratch_operands = 0 : i64, tpu.core_type = #tpu.core_type<tc>, window_params = [{transform_indices = @transform_0, window_bounds = array<i64: 512, 8>}, {transform_indices = @transform_1, window_bounds = array<i64: 8, 32>}, {transform_indices = @transform_2, window_bounds = array<i64: 1, 32>}, {transform_indices = @transform_3, window_bounds = array<i64: 512, 32>}, {transform_indices = @transform_4, window_bounds = array<i64: 512, 32>}]} {
    %c0 = arith.constant 0 : index
    %c0_0 = arith.constant 0 : index
    %0 = vector.load %arg2[%c0, %c0_0] : memref<512x8xbf16, #tpu.memory_space<vmem>>, vector<512x8xbf16>
    %c0_1 = arith.constant 0 : index
    %c0_2 = arith.constant 0 : index
    %1 = vector.load %arg3[%c0_1, %c0_2] : memref<8x32xbf16, #tpu.memory_space<vmem>>, vector<8x32xbf16>
    %cst = arith.constant dense<0.000000e+00> : vector<512x32xf32>
    %2 = tpu.matmul %0, %1, %cst {dimension_numbers = #tpu.dot_dimension_numbers<[1], [0], [0], [1], [0, 0, 1, 1], [], []>} : vector<512x8xbf16>, vector<8x32xbf16>, vector<512x32xf32> -> vector<512x32xf32>
    %c0_3 = arith.constant 0 : index
    %c0_4 = arith.constant 0 : index
    %3 = vector.load %arg4[%c0_3, %c0_4] : memref<1x32xf32, #tpu.memory_space<vmem>>, vector<1x32xf32>
    %4 = vector.broadcast %3 : vector<1x32xf32> to vector<512x32xf32>
    %5 = arith.addf %2, %4 : vector<512x32xf32>
    %c0_5 = arith.constant 0 : index
    %c0_6 = arith.constant 0 : index
    %6 = vector.load %arg5[%c0_5, %c0_6] : memref<512x32xbf16, #tpu.memory_space<vmem>>, vector<512x32xbf16>
    %7 = arith.extf %6 : vector<512x32xbf16> to vector<512x32xf32>
    %8 = arith.addf %5, %7 : vector<512x32xf32>
    %cst_7 = arith.constant 0.000000e+00 : f32
    %9 = vector.broadcast %cst_7 : f32 to vector<512x32xf32>
    %10 = arith.maximumf %8, %9 : vector<512x32xf32>
    %c0_8 = arith.constant 0 : index
    %c0_9 = arith.constant 0 : index
    %11 = vector.load %arg6[%c0_8, %c0_9] : memref<512x32xf32, #tpu.memory_space<vmem>>, vector<512x32xf32>
    tpu.vector_store %arg6[%c0_8, %c0_9], %10 {strides = array<i32>} : memref<512x32xf32, #tpu.memory_space<vmem>>, vector<512x32xf32>,
    return
  }
  func.func @transform_0(%arg0: i32, %arg1: i32) -> (i32, i32) {
    %c0_i32 = arith.constant 0 : i32
    %c0_i32_0 = arith.constant 0 : i32
    return %arg0, %c0_i32 : i32, i32
  }
  func.func @transform_1(%arg0: i32, %arg1: i32) -> (i32, i32) {
    %c0_i32 = arith.constant 0 : i32
    %c0_i32_0 = arith.constant 0 : i32
    return %c0_i32, %arg1 : i32, i32
  }
  func.func @transform_2(%arg0: i32, %arg1: i32) -> (i32, i32) {
    %c0_i32 = arith.constant 0 : i32
    %c0_i32_0 = arith.constant 0 : i32
    return %c0_i32, %arg1 : i32, i32
  }
  func.func @transform_3(%arg0: i32, %arg1: i32) -> (i32, i32) {
    %c0_i32 = arith.constant 0 : i32
    return %arg0, %arg1 : i32, i32
  }
  func.func @transform_4(%arg0: i32, %arg1: i32) -> (i32, i32) {
    %c0_i32 = arith.constant 0 : i32
    return %arg0, %arg1 : i32, i32
  }
}

</mosaic_0001>

<llo_original>
// kernel: _lambda_.3
$region0: #{_lambda_.3}
  #allocation0 [shape = 'u32[]', space=smem, size = 0x4, offset = 0x4, fixed_abs, tag = 'smem constant byte address 0x4 - core index']
  #allocation1 [shape = 'u32[144,128]{1,0:T(1,128)}', space=vmem, size = 0x12000, scoped, tag = 'internal scratch']
  %s0 = inlined_call_operand.vmem [shape: bf16[512,32], index: 0, kind: input, shape index: {}]
  %s1 = inlined_call_operand.vmem [shape: bf16[32,8], index: 1, kind: input, shape index: {}]
  %s2 = inlined_call_operand.vmem [shape: f32[1,8], index: 2, kind: input, shape index: {}]
  %s3 = inlined_call_operand.vmem [shape: f32[512,8], index: 3, kind: output, shape index: {}]
  %s4 = sld [smem:[#allocation0]]
  $region22: #{_lambda_.3} parent=0
    _
  %s6 = ssub.s32 1, %s4
  %s7 = scalar_select 0, %s6, %s4
  // Predicated region
  $region2: #{_lambda_.3} parent=0 // pred_check
    _
  $region3: #{_lambda_.3} parent=0 // pred_check_branch
    %9 = sbr.rel (0) target = $region5
  $region4: #{_lambda_.3} parent=0 // pred_region
    _
  $region5: #{_lambda_.3} parent=0 // pred_fallthru
    _
  // Predicated region
  $region6: #{_lambda_.3} parent=0 // pred_check
    _
  $region7: #{_lambda_.3} parent=0 // pred_check_branch
    %11 = sbr.rel (0) target = $region9
  $region8: #{_lambda_.3} parent=0 // pred_region
    _
  $region9: #{_lambda_.3} parent=0 // pred_fallthru
    _
  // Predicated region
  $region10: #{_lambda_.3} parent=0 // pred_check
    _
  $region11: #{_lambda_.3} parent=0 // pred_check_branch
    %13 = sbr.rel (0) target = $region13
  $region12: #{_lambda_.3} parent=0 // pred_region
    _
  $region13: #{_lambda_.3} parent=0 // pred_fallthru
    _
  %v15 = vld [vmem:[%s0] sm:$0xf]
  %v16 = vld [vmem:[%s0 + $0x4] sm:$0xf]
  %v17 = vld [vmem:[%s0 + $0x8] sm:$0xf]
  %v18 = vld [vmem:[%s0 + $0xc] sm:$0xf]
  %v19 = vld [vmem:[%s0 + $0x10] sm:$0xf]
  %v20 = vld [vmem:[%s0 + $0x14] sm:$0xf]
  %v21 = vld [vmem:[%s0 + $0x18] sm:$0xf]
  %v22 = vld [vmem:[%s0 + $0x1c] sm:$0xf]
  %v23 = vld [vmem:[%s0 + $0x20] sm:$0xf]
  %v24 = vld [vmem:[%s0 + $0x24] sm:$0xf]
  %v25 = vld [vmem:[%s0 + $0x28] sm:$0xf]
  %v26 = vld [vmem:[%s0 + $0x2c] sm:$0xf]
  %v27 = vld [vmem:[%s0 + $0x30] sm:$0xf]
  %v28 = vld [vmem:[%s0 + $0x34] sm:$0xf]
  %v29 = vld [vmem:[%s0 + $0x38] sm:$0xf]
  %v30 = vld [vmem:[%s0 + $0x3c] sm:$0xf]
  %v31 = vld [vmem:[%s0 + $0x40] sm:$0xf]
  %v32 = vld [vmem:[%s0 + $0x44] sm:$0xf]
  %v33 = vld [vmem:[%s0 + $0x48] sm:$0xf]
  %v34 = vld [vmem:[%s0 + $0x4c] sm:$0xf]
  %v35 = vld [vmem:[%s0 + $0x50] sm:$0xf]
  %v36 = vld [vmem:[%s0 + $0x54] sm:$0xf]
  %v37 = vld [vmem:[%s0 + $0x58] sm:$0xf]
  %v38 = vld [vmem:[%s0 + $0x5c] sm:$0xf]
  %v39 = vld [vmem:[%s0 + $0x60] sm:$0xf]
  %v40 = vld [vmem:[%s0 + $0x64] sm:$0xf]
  %v41 = vld [vmem:[%s0 + $0x68] sm:$0xf]
  %v42 = vld [vmem:[%s0 + $0x6c] sm:$0xf]
  %v43 = vld [vmem:[%s0 + $0x70] sm:$0xf]
  %v44 = vld [vmem:[%s0 + $0x74] sm:$0xf]
  %v45 = vld [vmem:[%s0 + $0x78] sm:$0xf]
  %v46 = vld [vmem:[%s0 + $0x7c] sm:$0xf]
  %v47 = vld [vmem:[%s0 + $0x80] sm:$0xf]
  %v48 = vld [vmem:[%s0 + $0x84] sm:$0xf]
  %v49 = vld [vmem:[%s0 + $0x88] sm:$0xf]
  %v50 = vld [vmem:[%s0 + $0x8c] sm:$0xf]
  %v51 = vld [vmem:[%s0 + $0x90] sm:$0xf]
  %v52 = vld [vmem:[%s0 + $0x94] sm:$0xf]
  %v53 = vld [vmem:[%s0 + $0x98] sm:$0xf]
  %v54 = vld [vmem:[%s0 + $0x9c] sm:$0xf]
  %v55 = vld [vmem:[%s0 + $0xa0] sm:$0xf]
  %v56 = vld [vmem:[%s0 + $0xa4] sm:$0xf]
  %v57 = vld [vmem:[%s0 + $0xa8] sm:$0xf]
  %v58 = vld [vmem:[%s0 + $0xac] sm:$0xf]
  %v59 = vld [vmem:[%s0 + $0xb0] sm:$0xf]
  %v60 = vld [vmem:[%s0 + $0xb4] sm:$0xf]
  %v61 = vld [vmem:[%s0 + $0xb8] sm:$0xf]
  %v62 = vld [vmem:[%s0 + $0xbc] sm:$0xf]
  %v63 = vld [vmem:[%s0 + $0xc0] sm:$0xf]
  %v64 = vld [vmem:[%s0 + $0xc4] sm:$0xf]
  %v65 = vld [vmem:[%s0 + $0xc8] sm:$0xf]
  %v66 = vld [vmem:[%s0 + $0xcc] sm:$0xf]
  %v67 = vld [vmem:[%s0 + $0xd0] sm:$0xf]
  %v68 = vld [vmem:[%s0 + $0xd4] sm:$0xf]
  %v69 = vld [vmem:[%s0 + $0xd8] sm:$0xf]
  %v70 = vld [vmem:[%s0 + $0xdc] sm:$0xf]
  %v71 = vld [vmem:[%s0 + $0xe0] sm:$0xf]
  %v72 = vld [vmem:[%s0 + $0xe4] sm:$0xf]
  %v73 = vld [vmem:[%s0 + $0xe8] sm:$0xf]
  %v74 = vld [vmem:[%s0 + $0xec] sm:$0xf]
  %v75 = vld [vmem:[%s0 + $0xf0] sm:$0xf]
  %v76 = vld [vmem:[%s0 + $0xf4] sm:$0xf]
  %v77 = vld [vmem:[%s0 + $0xf8] sm:$0xf]
  %v78 = vld [vmem:[%s0 + $0xfc] sm:$0xf]
  %v79 = vld [vmem:[%s1] sm:$0xf]
  %v80 = vld [vmem:[%s1 + $0x4] sm:$0xf]
  %v81 = vld [vmem:[%s1 + $0x8] sm:$0xf]
  %v82 = vld [vmem:[%s1 + $0xc] sm:$0xf]
  %v83 = vld [vmem:[%s2] sm:$0x1]
  %v85 = vlaneseq
  %v86 = vshrl.u32 %v85, 7
  %v87 = vsub.s32 0, %v86
  %v88 = vrot.slane %v83, %v87
  %v154 = vunpack.c.l.b16 %v15
  %v155 = vunpack.c.l.b16 %v16
  %v156 = vunpack.c.l.b16 %v17
  %v157 = vunpack.c.l.b16 %v18
  %v158 = vunpack.c.l.b16 %v19
  %v159 = vunpack.c.l.b16 %v20
  %v160 = vunpack.c.l.b16 %v21
  %v161 = vunpack.c.l.b16 %v22
  %v162 = vunpack.c.l.b16 %v23
  %v163 = vunpack.c.l.b16 %v24
  %v164 = vunpack.c.l.b16 %v25
  %v165 = vunpack.c.l.b16 %v26
  %v166 = vunpack.c.l.b16 %v27
  %v167 = vunpack.c.l.b16 %v28
  %v168 = vunpack.c.l.b16 %v29
  %v169 = vunpack.c.l.b16 %v30
  %v170 = vunpack.c.l.b16 %v31
  %v171 = vunpack.c.l.b16 %v32
  %v172 = vunpack.c.l.b16 %v33
  %v173 = vunpack.c.l.b16 %v34
  %v174 = vunpack.c.l.b16 %v35
  %v175 = vunpack.c.l.b16 %v36
  %v176 = vunpack.c.l.b16 %v37
  %v177 = vunpack.c.l.b16 %v38
  %v178 = vunpack.c.l.b16 %v39
  %v179 = vunpack.c.l.b16 %v40
  %v180 = vunpack.c.l.b16 %v41
  %v181 = vunpack.c.l.b16 %v42
  %v182 = vunpack.c.l.b16 %v43
  %v183 = vunpack.c.l.b16 %v44
  %v184 = vunpack.c.l.b16 %v45
  %v185 = vunpack.c.l.b16 %v46
  %v186 = vunpack.c.l.b16 %v47
  %v187 = vunpack.c.l.b16 %v48
  %v188 = vunpack.c.l.b16 %v49
  %v189 = vunpack.c.l.b16 %v50
  %v190 = vunpack.c.l.b16 %v51
  %v191 = vunpack.c.l.b16 %v52
  %v192 = vunpack.c.l.b16 %v53
  %v193 = vunpack.c.l.b16 %v54
  %v194 = vunpack.c.l.b16 %v55
  %v195 = vunpack.c.l.b16 %v56
  %v196 = vunpack.c.l.b16 %v57
  %v197 = vunpack.c.l.b16 %v58
  %v198 = vunpack.c.l.b16 %v59
  %v199 = vunpack.c.l.b16 %v60
  %v200 = vunpack.c.l.b16 %v61
  %v201 = vunpack.c.l.b16 %v62
  %v202 = vunpack.c.l.b16 %v63
  %v203 = vunpack.c.l.b16 %v64
  %v204 = vunpack.c.l.b16 %v65
  %v205 = vunpack.c.l.b16 %v66
  %v206 = vunpack.c.l.b16 %v67
  %v207 = vunpack.c.l.b16 %v68
  %v208 = vunpack.c.l.b16 %v69
  %v209 = vunpack.c.l.b16 %v70
  %v210 = vunpack.c.l.b16 %v71
  %v211 = vunpack.c.l.b16 %v72
  %v212 = vunpack.c.l.b16 %v73
  %v213 = vunpack.c.l.b16 %v74
  %v214 = vunpack.c.l.b16 %v75
  %v215 = vunpack.c.l.b16 %v76
  %v216 = vunpack.c.l.b16 %v77
  %v217 = vunpack.c.l.b16 %v78
  %v218 = vpack.c.b16 %v155, %v154
  %v219 = vpack.c.b16 %v157, %v156
  %v220 = vpack.c.b16 %v159, %v158
  %v221 = vpack.c.b16 %v161, %v160
  %v222 = vpack.c.b16 %v163, %v162
  %v223 = vpack.c.b16 %v165, %v164
  %v224 = vpack.c.b16 %v167, %v166
  %v225 = vpack.c.b16 %v169, %v168
  %v226 = vpack.c.b16 %v171, %v170
  %v227 = vpack.c.b16 %v173, %v172
  %v228 = vpack.c.b16 %v175, %v174
  %v229 = vpack.c.b16 %v177, %v176
  %v230 = vpack.c.b16 %v179, %v178
  %v231 = vpack.c.b16 %v181, %v180
  %v232 = vpack.c.b16 %v183, %v182
  %v233 = vpack.c.b16 %v185, %v184
  %v234 = vpack.c.b16 %v187, %v186
  %v235 = vpack.c.b16 %v189, %v188
  %v236 = vpack.c.b16 %v191, %v190
  %v237 = vpack.c.b16 %v193, %v192
  %v238 = vpack.c.b16 %v195, %v194
  %v239 = vpack.c.b16 %v197, %v196
  %v240 = vpack.c.b16 %v199, %v198
  %v241 = vpack.c.b16 %v201, %v200
  %v242 = vpack.c.b16 %v203, %v202
  %v243 = vpack.c.b16 %v205, %v204
  %v244 = vpack.c.b16 %v207, %v206
  %v245 = vpack.c.b16 %v209, %v208
  %v246 = vpack.c.b16 %v211, %v210
  %v247 = vpack.c.b16 %v213, %v212
  %v248 = vpack.c.b16 %v215, %v214
  %v249 = vpack.c.b16 %v217, %v216
  %v254 = vunpack.c.l.b16 %v79
  %v255 = vunpack.c.l.b16 %v80
  %v256 = vunpack.c.l.b16 %v81
  %v257 = vunpack.c.l.b16 %v82
  %v258 = vpack.c.b16 %v255, %v254
  %v259 = vpack.c.b16 %v257, %v256
  %vm262 = vcmask 261120
  %v264 = vsel %vm262, %v218, 0
  %v267 = vsel %vm262, %v219, 0
  %v270 = vsel %vm262, %v220, 0
  %v273 = vsel %vm262, %v221, 0
  %v276 = vsel %vm262, %v222, 0
  %v279 = vsel %vm262, %v223, 0
  %v282 = vsel %vm262, %v224, 0
  %v285 = vsel %vm262, %v225, 0
  %v288 = vsel %vm262, %v226, 0
  %v291 = vsel %vm262, %v227, 0
  %v294 = vsel %vm262, %v228, 0
  %v297 = vsel %vm262, %v229, 0
  %v300 = vsel %vm262, %v230, 0
  %v303 = vsel %vm262, %v231, 0
  %v306 = vsel %vm262, %v232, 0
  %v309 = vsel %vm262, %v233, 0
  %v312 = vsel %vm262, %v234, 0
  %v315 = vsel %vm262, %v235, 0
  %v318 = vsel %vm262, %v236, 0
  %v321 = vsel %vm262, %v237, 0
  %v324 = vsel %vm262, %v238, 0
  %v327 = vsel %vm262, %v239, 0
  %v330 = vsel %vm262, %v240, 0
  %v333 = vsel %vm262, %v241, 0
  %v336 = vsel %vm262, %v242, 0
  %v339 = vsel %vm262, %v243, 0
  %v342 = vsel %vm262, %v244, 0
  %v345 = vsel %vm262, %v245, 0
  %v348 = vsel %vm262, %v246, 0
  %v351 = vsel %vm262, %v247, 0
  %v354 = vsel %vm262, %v248, 0
  %v357 = vsel %vm262, %v249, 0
  %359 = vmatprep.subr.bf16.mxu0 0
  %360 = vmatpush1.bf16.msra.mxu0 %v258
  %361 = vmatprep.subr.bf16.mxu0 0
  %362 = vmatpush1.bf16.msra.mxu0 %v259
  %363 = vmatprep.subr.bf16.mxu0 0
  %364 = vmatpush1.bf16.msra.mxu0 0
  %365 = vmatprep.subr.bf16.mxu0 0
  %366 = vmatpush1.bf16.msra.mxu0 0
  %367 = vmatprep.subr.bf16.mxu0 0
  %368 = vmatpush1.bf16.msra.mxu0 0
  %369 = vmatprep.subr.bf16.mxu0 0
  %370 = vmatpush1.bf16.msra.mxu0 0
  %371 = vmatprep.subr.bf16.mxu0 0
  %372 = vmatpush1.bf16.msra.mxu0 0
  %373 = vmatprep.subr.bf16.mxu0 0
  %374 = vmatpush1.bf16.msra.mxu0 0
  %375 = vmatprep.subr.bf16.mxu0 0
  %376 = vmatpush1.bf16.msra.mxu0 0
  %377 = vmatprep.subr.bf16.mxu0 0
  %378 = vmatpush1.bf16.msra.mxu0 0
  %379 = vmatprep.subr.bf16.mxu0 0
  %380 = vmatpush1.bf16.msra.mxu0 0
  %381 = vmatprep.subr.bf16.mxu0 0
  %382 = vmatpush1.bf16.msra.mxu0 0
  %383 = vmatprep.subr.bf16.mxu0 0
  %384 = vmatpush1.bf16.msra.mxu0 0
  %385 = vmatprep.subr.bf16.mxu0 0
  %386 = vmatpush1.bf16.msra.mxu0 0
  %387 = vmatprep.subr.bf16.mxu0 0
  %388 = vmatpush1.bf16.msra.mxu0 0
  %389 = vmatprep.subr.bf16.mxu0 0
  %390 = vmatpush1.bf16.msra.mxu0 0
  %391 = vmatprep.mubr.bf16.mxu0 0
  %392 = vmatmul.mubr.bf16.gmra.mrb[0].mxu0 %v264
  %v393 = vpop.f32.mrb[0].mxu0
  %v394 = vadd.f32 %v88, %v393
  %v395 = vpop.f32.mrb[0].mxu0
  %v396 = vpop.f32.mrb[0].mxu0
  %v397 = vadd.f32 %v88, %v396
  %v398 = vpop.f32.mrb[0].mxu0
  %399 = vmatprep.mubr.bf16.mxu0 0
  %400 = vmatmul.mubr.bf16.gmra.mrb[0].mxu0 %v267
  %v401 = vpop.f32.mrb[0].mxu0
  %v402 = vadd.f32 %v88, %v401
  %v403 = vpop.f32.mrb[0].mxu0
  %v404 = vpop.f32.mrb[0].mxu0
  %v405 = vadd.f32 %v88, %v404
  %v406 = vpop.f32.mrb[0].mxu0
  %407 = vmatprep.mubr.bf16.mxu0 0
  %408 = vmatmul.mubr.bf16.gmra.mrb[0].mxu0 %v270
  %v409 = vpop.f32.mrb[0].mxu0
  %v410 = vadd.f32 %v88, %v409
  %v411 = vpop.f32.mrb[0].mxu0
  %v412 = vpop.f32.mrb[0].mxu0
  %v413 = vadd.f32 %v88, %v412
  %v414 = vpop.f32.mrb[0].mxu0
  %415 = vmatprep.mubr.bf16.mxu0 0
  %416 = vmatmul.mubr.bf16.gmra.mrb[0].mxu0 %v273
  %v417 = vpop.f32.mrb[0].mxu0
  %v418 = vadd.f32 %v88, %v417
  %v419 = vpop.f32.mrb[0].mxu0
  %v420 = vpop.f32.mrb[0].mxu0
  %v421 = vadd.f32 %v88, %v420
  %v422 = vpop.f32.mrb[0].mxu0
  %423 = vmatprep.mubr.bf16.mxu0 0
  %424 = vmatmul.mubr.bf16.gmra.mrb[0].mxu0 %v276
  %v425 = vpop.f32.mrb[0].mxu0
  %v426 = vadd.f32 %v88, %v425
  %v427 = vpop.f32.mrb[0].mxu0
  %v428 = vpop.f32.mrb[0].mxu0
  %v429 = vadd.f32 %v88, %v428
  %v430 = vpop.f32.mrb[0].mxu0
  %431 = vmatprep.mubr.bf16.mxu0 0
  %432 = vmatmul.mubr.bf16.gmra.mrb[0].mxu0 %v279
  %v433 = vpop.f32.mrb[0].mxu0
  %v434 = vadd.f32 %v88, %v433
  %v435 = vpop.f32.mrb[0].mxu0
  %v436 = vpop.f32.mrb[0].mxu0
  %v437 = vadd.f32 %v88, %v436
  %v438 = vpop.f32.mrb[0].mxu0
  %439 = vmatprep.mubr.bf16.mxu0 0
  %440 = vmatmul.mubr.bf16.gmra.mrb[0].mxu0 %v282
  %v441 = vpop.f32.mrb[0].mxu0
  %v442 = vadd.f32 %v88, %v441
  %v443 = vpop.f32.mrb[0].mxu0
  %v444 = vpop.f32.mrb[0].mxu0
  %v445 = vadd.f32 %v88, %v444
  %v446 = vpop.f32.mrb[0].mxu0
  %447 = vmatprep.mubr.bf16.mxu0 0
  %448 = vmatmul.mubr.bf16.gmra.mrb[0].mxu0 %v285
  %v449 = vpop.f32.mrb[0].mxu0
  %v450 = vadd.f32 %v88, %v449
  %v451 = vpop.f32.mrb[0].mxu0
  %v452 = vpop.f32.mrb[0].mxu0
  %v453 = vadd.f32 %v88, %v452
  %v454 = vpop.f32.mrb[0].mxu0
  %455 = vmatprep.mubr.bf16.mxu0 0
  %456 = vmatmul.mubr.bf16.gmra.mrb[0].mxu0 %v288
  %v457 = vpop.f32.mrb[0].mxu0
  %v458 = vadd.f32 %v88, %v457
  %v459 = vpop.f32.mrb[0].mxu0
  %v460 = vpop.f32.mrb[0].mxu0
  %v461 = vadd.f32 %v88, %v460
  %v462 = vpop.f32.mrb[0].mxu0
  %463 = vmatprep.mubr.bf16.mxu0 0
  %464 = vmatmul.mubr.bf16.gmra.mrb[0].mxu0 %v291
  %v465 = vpop.f32.mrb[0].mxu0
  %v466 = vadd.f32 %v88, %v465
  %v467 = vpop.f32.mrb[0].mxu0
  %v468 = vpop.f32.mrb[0].mxu0
  %v469 = vadd.f32 %v88, %v468
  %v470 = vpop.f32.mrb[0].mxu0
  %471 = vmatprep.mubr.bf16.mxu0 0
  %472 = vmatmul.mubr.bf16.gmra.mrb[0].mxu0 %v294
  %v473 = vpop.f32.mrb[0].mxu0
  %v474 = vadd.f32 %v88, %v473
  %v475 = vpop.f32.mrb[0].mxu0
  %v476 = vpop.f32.mrb[0].mxu0
  %v477 = vadd.f32 %v88, %v476
  %v478 = vpop.f32.mrb[0].mxu0
  %479 = vmatprep.mubr.bf16.mxu0 0
  %480 = vmatmul.mubr.bf16.gmra.mrb[0].mxu0 %v297
  %v481 = vpop.f32.mrb[0].mxu0
  %v482 = vadd.f32 %v88, %v481
  %v483 = vpop.f32.mrb[0].mxu0
  %v484 = vpop.f32.mrb[0].mxu0
  %v485 = vadd.f32 %v88, %v484
  %v486 = vpop.f32.mrb[0].mxu0
  %487 = vmatprep.mubr.bf16.mxu0 0
  %488 = vmatmul.mubr.bf16.gmra.mrb[0].mxu0 %v300
  %v489 = vpop.f32.mrb[0].mxu0
  %v490 = vadd.f32 %v88, %v489
  %v491 = vpop.f32.mrb[0].mxu0
  %v492 = vpop.f32.mrb[0].mxu0
  %v493 = vadd.f32 %v88, %v492
  %v494 = vpop.f32.mrb[0].mxu0
  %495 = vmatprep.mubr.bf16.mxu0 0
  %496 = vmatmul.mubr.bf16.gmra.mrb[0].mxu0 %v303
  %v497 = vpop.f32.mrb[0].mxu0
  %v498 = vadd.f32 %v88, %v497
  %v499 = vpop.f32.mrb[0].mxu0
  %v500 = vpop.f32.mrb[0].mxu0
  %v501 = vadd.f32 %v88, %v500
  %v502 = vpop.f32.mrb[0].mxu0
  %503 = vmatprep.mubr.bf16.mxu0 0
  %504 = vmatmul.mubr.bf16.gmra.mrb[0].mxu0 %v306
  %v505 = vpop.f32.mrb[0].mxu0
  %v506 = vadd.f32 %v88, %v505
  %v507 = vpop.f32.mrb[0].mxu0
  %v508 = vpop.f32.mrb[0].mxu0
  %v509 = vadd.f32 %v88, %v508
  %v510 = vpop.f32.mrb[0].mxu0
  %511 = vmatprep.mubr.bf16.mxu0 0
  %512 = vmatmul.mubr.bf16.gmra.mrb[0].mxu0 %v309
  %v513 = vpop.f32.mrb[0].mxu0
  %v514 = vadd.f32 %v88, %v513
  %v515 = vpop.f32.mrb[0].mxu0
  %v516 = vpop.f32.mrb[0].mxu0
  %v517 = vadd.f32 %v88, %v516
  %v518 = vpop.f32.mrb[0].mxu0
  %519 = vmatprep.mubr.bf16.mxu0 0
  %520 = vmatmul.mubr.bf16.gmra.mrb[0].mxu0 %v312
  %v521 = vpop.f32.mrb[0].mxu0
  %v522 = vadd.f32 %v88, %v521
  %v523 = vpop.f32.mrb[0].mxu0
  %v524 = vpop.f32.mrb[0].mxu0
  %v525 = vadd.f32 %v88, %v524
  %v526 = vpop.f32.mrb[0].mxu0
  %527 = vmatprep.mubr.bf16.mxu0 0
  %528 = vmatmul.mubr.bf16.gmra.mrb[0].mxu0 %v315
  %v529 = vpop.f32.mrb[0].mxu0
  %v530 = vadd.f32 %v88, %v529
  %v531 = vpop.f32.mrb[0].mxu0
  %v532 = vpop.f32.mrb[0].mxu0
  %v533 = vadd.f32 %v88, %v532
  %v534 = vpop.f32.mrb[0].mxu0
  %535 = vmatprep.mubr.bf16.mxu0 0
  %536 = vmatmul.mubr.bf16.gmra.mrb[0].mxu0 %v318
  %v537 = vpop.f32.mrb[0].mxu0
  %v538 = vadd.f32 %v88, %v537
  %v539 = vpop.f32.mrb[0].mxu0
  %v540 = vpop.f32.mrb[0].mxu0
  %v541 = vadd.f32 %v88, %v540
  %v542 = vpop.f32.mrb[0].mxu0
  %543 = vmatprep.mubr.bf16.mxu0 0
  %544 = vmatmul.mubr.bf16.gmra.mrb[0].mxu0 %v321
  %v545 = vpop.f32.mrb[0].mxu0
  %v546 = vadd.f32 %v88, %v545
  %v547 = vpop.f32.mrb[0].mxu0
  %v548 = vpop.f32.mrb[0].mxu0
  %v549 = vadd.f32 %v88, %v548
  %v550 = vpop.f32.mrb[0].mxu0
  %551 = vmatprep.mubr.bf16.mxu0 0
  %552 = vmatmul.mubr.bf16.gmra.mrb[0].mxu0 %v324
  %v553 = vpop.f32.mrb[0].mxu0
  %v554 = vadd.f32 %v88, %v553
  %v555 = vpop.f32.mrb[0].mxu0
  %v556 = vpop.f32.mrb[0].mxu0
  %v557 = vadd.f32 %v88, %v556
  %v558 = vpop.f32.mrb[0].mxu0
  %559 = vmatprep.mubr.bf16.mxu0 0
  %560 = vmatmul.mubr.bf16.gmra.mrb[0].mxu0 %v327
  %v561 = vpop.f32.mrb[0].mxu0
  %v562 = vadd.f32 %v88, %v561
  %v563 = vpop.f32.mrb[0].mxu0
  %v564 = vpop.f32.mrb[0].mxu0
  %v565 = vadd.f32 %v88, %v564
  %v566 = vpop.f32.mrb[0].mxu0
  %567 = vmatprep.mubr.bf16.mxu0 0
  %568 = vmatmul.mubr.bf16.gmra.mrb[0].mxu0 %v330
  %v569 = vpop.f32.mrb[0].mxu0
  %v570 = vadd.f32 %v88, %v569
  %v571 = vpop.f32.mrb[0].mxu0
  %v572 = vpop.f32.mrb[0].mxu0
  %v573 = vadd.f32 %v88, %v572
  %v574 = vpop.f32.mrb[0].mxu0
  %575 = vmatprep.mubr.bf16.mxu0 0
  %576 = vmatmul.mubr.bf16.gmra.mrb[0].mxu0 %v333
  %v577 = vpop.f32.mrb[0].mxu0
  %v578 = vadd.f32 %v88, %v577
  %v579 = vpop.f32.mrb[0].mxu0
  %v580 = vpop.f32.mrb[0].mxu0
  %v581 = vadd.f32 %v88, %v580
  %v582 = vpop.f32.mrb[0].mxu0
  %583 = vmatprep.mubr.bf16.mxu0 0
  %584 = vmatmul.mubr.bf16.gmra.mrb[0].mxu0 %v336
  %v585 = vpop.f32.mrb[0].mxu0
  %v586 = vadd.f32 %v88, %v585
  %v587 = vpop.f32.mrb[0].mxu0
  %v588 = vpop.f32.mrb[0].mxu0
  %v589 = vadd.f32 %v88, %v588
  %v590 = vpop.f32.mrb[0].mxu0
  %591 = vmatprep.mubr.bf16.mxu0 0
  %592 = vmatmul.mubr.bf16.gmra.mrb[0].mxu0 %v339
  %v593 = vpop.f32.mrb[0].mxu0
  %v594 = vadd.f32 %v88, %v593
  %v595 = vpop.f32.mrb[0].mxu0
  %v596 = vpop.f32.mrb[0].mxu0
  %v597 = vadd.f32 %v88, %v596
  %v598 = vpop.f32.mrb[0].mxu0
  %599 = vmatprep.mubr.bf16.mxu0 0
  %600 = vmatmul.mubr.bf16.gmra.mrb[0].mxu0 %v342
  %v601 = vpop.f32.mrb[0].mxu0
  %v602 = vadd.f32 %v88, %v601
  %v603 = vpop.f32.mrb[0].mxu0
  %v604 = vpop.f32.mrb[0].mxu0
  %v605 = vadd.f32 %v88, %v604
  %v606 = vpop.f32.mrb[0].mxu0
  %607 = vmatprep.mubr.bf16.mxu0 0
  %608 = vmatmul.mubr.bf16.gmra.mrb[0].mxu0 %v345
  %v609 = vpop.f32.mrb[0].mxu0
  %v610 = vadd.f32 %v88, %v609
  %v611 = vpop.f32.mrb[0].mxu0
  %v612 = vpop.f32.mrb[0].mxu0
  %v613 = vadd.f32 %v88, %v612
  %v614 = vpop.f32.mrb[0].mxu0
  %615 = vmatprep.mubr.bf16.mxu0 0
  %616 = vmatmul.mubr.bf16.gmra.mrb[0].mxu0 %v348
  %v617 = vpop.f32.mrb[0].mxu0
  %v618 = vadd.f32 %v88, %v617
  %v619 = vpop.f32.mrb[0].mxu0
  %v620 = vpop.f32.mrb[0].mxu0
  %v621 = vadd.f32 %v88, %v620
  %v622 = vpop.f32.mrb[0].mxu0
  %623 = vmatprep.mubr.bf16.mxu0 0
  %624 = vmatmul.mubr.bf16.gmra.mrb[0].mxu0 %v351
  %v625 = vpop.f32.mrb[0].mxu0
  %v626 = vadd.f32 %v88, %v625
  %v627 = vpop.f32.mrb[0].mxu0
  %v628 = vpop.f32.mrb[0].mxu0
  %v629 = vadd.f32 %v88, %v628
  %v630 = vpop.f32.mrb[0].mxu0
  %631 = vmatprep.mubr.bf16.mxu0 0
  %632 = vmatmul.mubr.bf16.gmra.mrb[0].mxu0 %v354
  %v633 = vpop.f32.mrb[0].mxu0
  %v634 = vadd.f32 %v88, %v633
  %v635 = vpop.f32.mrb[0].mxu0
  %v636 = vpop.f32.mrb[0].mxu0
  %v637 = vadd.f32 %v88, %v636
  %v638 = vpop.f32.mrb[0].mxu0
  %639 = vmatprep.mubr.bf16.mxu0 0
  %640 = vmatmul.mubr.bf16.gmra.mrb[0].mxu0 %v357
  %v641 = vpop.f32.mrb[0].mxu0
  %v642 = vadd.f32 %v88, %v641
  %v643 = vpop.f32.mrb[0].mxu0
  %v644 = vpop.f32.mrb[0].mxu0
  %v645 = vadd.f32 %v88, %v644
  %v646 = vpop.f32.mrb[0].mxu0
  %647 = vdwg.mxu0
  %v648 = vmax.f32 %v394, 0.0
  %v649 = vmax.f32 %v397, 0.0
  %v650 = vmax.f32 %v402, 0.0
  %v651 = vmax.f32 %v405, 0.0
  %v652 = vmax.f32 %v410, 0.0
  %v653 = vmax.f32 %v413, 0.0
  %v654 = vmax.f32 %v418, 0.0
  %v655 = vmax.f32 %v421, 0.0
  %v656 = vmax.f32 %v426, 0.0
  %v657 = vmax.f32 %v429, 0.0
  %v658 = vmax.f32 %v434, 0.0
  %v659 = vmax.f32 %v437, 0.0
  %v660 = vmax.f32 %v442, 0.0
  %v661 = vmax.f32 %v445, 0.0
  %v662 = vmax.f32 %v450, 0.0
  %v663 = vmax.f32 %v453, 0.0
  %v664 = vmax.f32 %v458, 0.0
  %v665 = vmax.f32 %v461, 0.0
  %v666 = vmax.f32 %v466, 0.0
  %v667 = vmax.f32 %v469, 0.0
  %v668 = vmax.f32 %v474, 0.0
  %v669 = vmax.f32 %v477, 0.0
  %v670 = vmax.f32 %v482, 0.0
  %v671 = vmax.f32 %v485, 0.0
  %v672 = vmax.f32 %v490, 0.0
  %v673 = vmax.f32 %v493, 0.0
  %v674 = vmax.f32 %v498, 0.0
  %v675 = vmax.f32 %v501, 0.0
  %v676 = vmax.f32 %v506, 0.0
  %v677 = vmax.f32 %v509, 0.0
  %v678 = vmax.f32 %v514, 0.0
  %v679 = vmax.f32 %v517, 0.0
  %v680 = vmax.f32 %v522, 0.0
  %v681 = vmax.f32 %v525, 0.0
  %v682 = vmax.f32 %v530, 0.0
  %v683 = vmax.f32 %v533, 0.0
  %v684 = vmax.f32 %v538, 0.0
  %v685 = vmax.f32 %v541, 0.0
  %v686 = vmax.f32 %v546, 0.0
  %v687 = vmax.f32 %v549, 0.0
  %v688 = vmax.f32 %v554, 0.0
  %v689 = vmax.f32 %v557, 0.0
  %v690 = vmax.f32 %v562, 0.0
  %v691 = vmax.f32 %v565, 0.0
  %v692 = vmax.f32 %v570, 0.0
  %v693 = vmax.f32 %v573, 0.0
  %v694 = vmax.f32 %v578, 0.0
  %v695 = vmax.f32 %v581, 0.0
  %v696 = vmax.f32 %v586, 0.0
  %v697 = vmax.f32 %v589, 0.0
  %v698 = vmax.f32 %v594, 0.0
  %v699 = vmax.f32 %v597, 0.0
  %v700 = vmax.f32 %v602, 0.0
  %v701 = vmax.f32 %v605, 0.0
  %v702 = vmax.f32 %v610, 0.0
  %v703 = vmax.f32 %v613, 0.0
  %v704 = vmax.f32 %v618, 0.0
  %v705 = vmax.f32 %v621, 0.0
  %v706 = vmax.f32 %v626, 0.0
  %v707 = vmax.f32 %v629, 0.0
  %v708 = vmax.f32 %v634, 0.0
  %v709 = vmax.f32 %v637, 0.0
  %v710 = vmax.f32 %v642, 0.0
  %v711 = vmax.f32 %v645, 0.0
  %vm712 = vcmask 64512
  %713 = vst.msk [vmem:[%s3] sm:$0xff] %vm712, %v648
  %714 = vst.msk [vmem:[%s3 + $0x8] sm:$0xff] %vm712, %v649
  %715 = vst.msk [vmem:[%s3 + $0x10] sm:$0xff] %vm712, %v650
  %716 = vst.msk [vmem:[%s3 + $0x18] sm:$0xff] %vm712, %v651
  %717 = vst.msk [vmem:[%s3 + $0x20] sm:$0xff] %vm712, %v652
  %718 = vst.msk [vmem:[%s3 + $0x28] sm:$0xff] %vm712, %v653
  %719 = vst.msk [vmem:[%s3 + $0x30] sm:$0xff] %vm712, %v654
  %720 = vst.msk [vmem:[%s3 + $0x38] sm:$0xff] %vm712, %v655
  %721 = vst.msk [vmem:[%s3 + $0x40] sm:$0xff] %vm712, %v656
  %722 = vst.msk [vmem:[%s3 + $0x48] sm:$0xff] %vm712, %v657
  %723 = vst.msk [vmem:[%s3 + $0x50] sm:$0xff] %vm712, %v658
  %724 = vst.msk [vmem:[%s3 + $0x58] sm:$0xff] %vm712, %v659
  %725 = vst.msk [vmem:[%s3 + $0x60] sm:$0xff] %vm712, %v660
  %726 = vst.msk [vmem:[%s3 + $0x68] sm:$0xff] %vm712, %v661
  %727 = vst.msk [vmem:[%s3 + $0x70] sm:$0xff] %vm712, %v662
  %728 = vst.msk [vmem:[%s3 + $0x78] sm:$0xff] %vm712, %v663
  %729 = vst.msk [vmem:[%s3 + $0x80] sm:$0xff] %vm712, %v664
  %730 = vst.msk [vmem:[%s3 + $0x88] sm:$0xff] %vm712, %v665
  %731 = vst.msk [vmem:[%s3 + $0x90] sm:$0xff] %vm712, %v666
  %732 = vst.msk [vmem:[%s3 + $0x98] sm:$0xff] %vm712, %v667
  %733 = vst.msk [vmem:[%s3 + $0xa0] sm:$0xff] %vm712, %v668
  %734 = vst.msk [vmem:[%s3 + $0xa8] sm:$0xff] %vm712, %v669
  %735 = vst.msk [vmem:[%s3 + $0xb0] sm:$0xff] %vm712, %v670
  %736 = vst.msk [vmem:[%s3 + $0xb8] sm:$0xff] %vm712, %v671
  %737 = vst.msk [vmem:[%s3 + $0xc0] sm:$0xff] %vm712, %v672
  %738 = vst.msk [vmem:[%s3 + $0xc8] sm:$0xff] %vm712, %v673
  %739 = vst.msk [vmem:[%s3 + $0xd0] sm:$0xff] %vm712, %v674
  %740 = vst.msk [vmem:[%s3 + $0xd8] sm:$0xff] %vm712, %v675
  %741 = vst.msk [vmem:[%s3 + $0xe0] sm:$0xff] %vm712, %v676
  %742 = vst.msk [vmem:[%s3 + $0xe8] sm:$0xff] %vm712, %v677
  %743 = vst.msk [vmem:[%s3 + $0xf0] sm:$0xff] %vm712, %v678
  %744 = vst.msk [vmem:[%s3 + $0xf8] sm:$0xff] %vm712, %v679
  %745 = vst.msk [vmem:[%s3 + $0x100] sm:$0xff] %vm712, %v680
  %746 = vst.msk [vmem:[%s3 + $0x108] sm:$0xff] %vm712, %v681
  %747 = vst.msk [vmem:[%s3 + $0x110] sm:$0xff] %vm712, %v682
  %748 = vst.msk [vmem:[%s3 + $0x118] sm:$0xff] %vm712, %v683
  %749 = vst.msk [vmem:[%s3 + $0x120] sm:$0xff] %vm712, %v684
  %750 = vst.msk [vmem:[%s3 + $0x128] sm:$0xff] %vm712, %v685
  %751 = vst.msk [vmem:[%s3 + $0x130] sm:$0xff] %vm712, %v686
  %752 = vst.msk [vmem:[%s3 + $0x138] sm:$0xff] %vm712, %v687
  %753 = vst.msk [vmem:[%s3 + $0x140] sm:$0xff] %vm712, %v688
  %754 = vst.msk [vmem:[%s3 + $0x148] sm:$0xff] %vm712, %v689
  %755 = vst.msk [vmem:[%s3 + $0x150] sm:$0xff] %vm712, %v690
  %756 = vst.msk [vmem:[%s3 + $0x158] sm:$0xff] %vm712, %v691
  %757 = vst.msk [vmem:[%s3 + $0x160] sm:$0xff] %vm712, %v692
  %758 = vst.msk [vmem:[%s3 + $0x168] sm:$0xff] %vm712, %v693
  %759 = vst.msk [vmem:[%s3 + $0x170] sm:$0xff] %vm712, %v694
  %760 = vst.msk [vmem:[%s3 + $0x178] sm:$0xff] %vm712, %v695
  %761 = vst.msk [vmem:[%s3 + $0x180] sm:$0xff] %vm712, %v696
  %762 = vst.msk [vmem:[%s3 + $0x188] sm:$0xff] %vm712, %v697
  %763 = vst.msk [vmem:[%s3 + $0x190] sm:$0xff] %vm712, %v698
  %764 = vst.msk [vmem:[%s3 + $0x198] sm:$0xff] %vm712, %v699
  %765 = vst.msk [vmem:[%s3 + $0x1a0] sm:$0xff] %vm712, %v700
  %766 = vst.msk [vmem:[%s3 + $0x1a8] sm:$0xff] %vm712, %v701
  %767 = vst.msk [vmem:[%s3 + $0x1b0] sm:$0xff] %vm712, %v702
  %768 = vst.msk [vmem:[%s3 + $0x1b8] sm:$0xff] %vm712, %v703
  %769 = vst.msk [vmem:[%s3 + $0x1c0] sm:$0xff] %vm712, %v704
  %770 = vst.msk [vmem:[%s3 + $0x1c8] sm:$0xff] %vm712, %v705
  %771 = vst.msk [vmem:[%s3 + $0x1d0] sm:$0xff] %vm712, %v706
  %772 = vst.msk [vmem:[%s3 + $0x1d8] sm:$0xff] %vm712, %v707
  %773 = vst.msk [vmem:[%s3 + $0x1e0] sm:$0xff] %vm712, %v708
  %774 = vst.msk [vmem:[%s3 + $0x1e8] sm:$0xff] %vm712, %v709
  %775 = vst.msk [vmem:[%s3 + $0x1f0] sm:$0xff] %vm712, %v710
  %776 = vst.msk [vmem:[%s3 + $0x1f8] sm:$0xff] %vm712, %v711
  // Predicated region
  $region14: #{_lambda_.3} parent=0 // pred_check
    _
  $region15: #{_lambda_.3} parent=0 // pred_check_branch
    %778 = sbr.rel (0) target = $region17
  $region16: #{_lambda_.3} parent=0 // pred_region
    _
  $region17: #{_lambda_.3} parent=0 // pred_fallthru
    _
  // Predicated region
  $region18: #{_lambda_.3} parent=0 // pred_check
    _
  $region19: #{_lambda_.3} parent=0 // pred_check_branch
    %780 = sbr.rel (0) target = $region21
  $region20: #{_lambda_.3} parent=0 // pred_region
    _
  $region21: #{_lambda_.3} parent=0 // pred_fallthru
    _

// kernel: _lambda_.4
$region0: #{_lambda_.4}
  #allocation0 [shape = 'u32[]', space=smem, size = 0x4, offset = 0x4, fixed_abs, tag = 'smem constant byte address 0x4 - core index']
  #allocation1 [shape = 'u32[144,128]{1,0:T(1,128)}', space=vmem, size = 0x12000, scoped, tag = 'internal scratch']
  %s0 = inlined_call_operand.vmem [shape: bf16[512,72], index: 0, kind: input, shape index: {}]
  %s1 = inlined_call_operand.vmem [shape: bf16[72,8], index: 1, kind: input, shape index: {}]
  %s2 = inlined_call_operand.vmem [shape: f32[1,8], index: 2, kind: input, shape index: {}]
  %s3 = inlined_call_operand.vmem [shape: f32[512,8], index: 3, kind: output, shape index: {}]
  %s4 = sld [smem:[#allocation0]]
  $region22: #{_lambda_.4} parent=0
    _
  %s6 = ssub.s32 1, %s4
  %s7 = scalar_select 0, %s6, %s4
  // Predicated region
  $region2: #{_lambda_.4} parent=0 // pred_check
    _
  $region3: #{_lambda_.4} parent=0 // pred_check_branch
    %9 = sbr.rel (0) target = $region5
  $region4: #{_lambda_.4} parent=0 // pred_region
    _
  $region5: #{_lambda_.4} parent=0 // pred_fallthru
    _
  // Predicated region
  $region6: #{_lambda_.4} parent=0 // pred_check
    _
  $region7: #{_lambda_.4} parent=0 // pred_check_branch
    %11 = sbr.rel (0) target = $region9
  $region8: #{_lambda_.4} parent=0 // pred_region
    _
  $region9: #{_lambda_.4} parent=0 // pred_fallthru
    _
  // Predicated region
  $region10: #{_lambda_.4} parent=0 // pred_check
    _
  $region11: #{_lambda_.4} parent=0 // pred_check_branch
    %13 = sbr.rel (0) target = $region13
  $region12: #{_lambda_.4} parent=0 // pred_region
    _
  $region13: #{_lambda_.4} parent=0 // pred_fallthru
    _
  %v15 = vld [vmem:[%s0] sm:$0xf]
  %v16 = vld [vmem:[%s0 + $0x4] sm:$0xf]
  %v17 = vld [vmem:[%s0 + $0x8] sm:$0xf]
  %v18 = vld [vmem:[%s0 + $0xc] sm:$0xf]
  %v19 = vld [vmem:[%s0 + $0x10] sm:$0xf]
  %v20 = vld [vmem:[%s0 + $0x14] sm:$0xf]
  %v21 = vld [vmem:[%s0 + $0x18] sm:$0xf]
  %v22 = vld [vmem:[%s0 + $0x1c] sm:$0xf]
  %v23 = vld [vmem:[%s0 + $0x20] sm:$0xf]
  %v24 = vld [vmem:[%s0 + $0x24] sm:$0xf]
  %v25 = vld [vmem:[%s0 + $0x28] sm:$0xf]
  %v26 = vld [vmem:[%s0 + $0x2c] sm:$0xf]
  %v27 = vld [vmem:[%s0 + $0x30] sm:$0xf]
  %v28 = vld [vmem:[%s0 + $0x34] sm:$0xf]
  %v29 = vld [vmem:[%s0 + $0x38] sm:$0xf]
  %v30 = vld [vmem:[%s0 + $0x3c] sm:$0xf]
  %v31 = vld [vmem:[%s0 + $0x40] sm:$0xf]
  %v32 = vld [vmem:[%s0 + $0x44] sm:$0xf]
  %v33 = vld [vmem:[%s0 + $0x48] sm:$0xf]
  %v34 = vld [vmem:[%s0 + $0x4c] sm:$0xf]
  %v35 = vld [vmem:[%s0 + $0x50] sm:$0xf]
  %v36 = vld [vmem:[%s0 + $0x54] sm:$0xf]
  %v37 = vld [vmem:[%s0 + $0x58] sm:$0xf]
  %v38 = vld [vmem:[%s0 + $0x5c] sm:$0xf]
  %v39 = vld [vmem:[%s0 + $0x60] sm:$0xf]
  %v40 = vld [vmem:[%s0 + $0x64] sm:$0xf]
  %v41 = vld [vmem:[%s0 + $0x68] sm:$0xf]
  %v42 = vld [vmem:[%s0 + $0x6c] sm:$0xf]
  %v43 = vld [vmem:[%s0 + $0x70] sm:$0xf]
  %v44 = vld [vmem:[%s0 + $0x74] sm:$0xf]
  %v45 = vld [vmem:[%s0 + $0x78] sm:$0xf]
  %v46 = vld [vmem:[%s0 + $0x7c] sm:$0xf]
  %v47 = vld [vmem:[%s0 + $0x80] sm:$0xf]
  %v48 = vld [vmem:[%s0 + $0x84] sm:$0xf]
  %v49 = vld [vmem:[%s0 + $0x88] sm:$0xf]
  %v50 = vld [vmem:[%s0 + $0x8c] sm:$0xf]
  %v51 = vld [vmem:[%s0 + $0x90] sm:$0xf]
  %v52 = vld [vmem:[%s0 + $0x94] sm:$0xf]
  %v53 = vld [vmem:[%s0 + $0x98] sm:$0xf]
  %v54 = vld [vmem:[%s0 + $0x9c] sm:$0xf]
  %v55 = vld [vmem:[%s0 + $0xa0] sm:$0xf]
  %v56 = vld [vmem:[%s0 + $0xa4] sm:$0xf]
  %v57 = vld [vmem:[%s0 + $0xa8] sm:$0xf]
  %v58 = vld [vmem:[%s0 + $0xac] sm:$0xf]
  %v59 = vld [vmem:[%s0 + $0xb0] sm:$0xf]
  %v60 = vld [vmem:[%s0 + $0xb4] sm:$0xf]
  %v61 = vld [vmem:[%s0 + $0xb8] sm:$0xf]
  %v62 = vld [vmem:[%s0 + $0xbc] sm:$0xf]
  %v63 = vld [vmem:[%s0 + $0xc0] sm:$0xf]
  %v64 = vld [vmem:[%s0 + $0xc4] sm:$0xf]
  %v65 = vld [vmem:[%s0 + $0xc8] sm:$0xf]
  %v66 = vld [vmem:[%s0 + $0xcc] sm:$0xf]
  %v67 = vld [vmem:[%s0 + $0xd0] sm:$0xf]
  %v68 = vld [vmem:[%s0 + $0xd4] sm:$0xf]
  %v69 = vld [vmem:[%s0 + $0xd8] sm:$0xf]
  %v70 = vld [vmem:[%s0 + $0xdc] sm:$0xf]
  %v71 = vld [vmem:[%s0 + $0xe0] sm:$0xf]
  %v72 = vld [vmem:[%s0 + $0xe4] sm:$0xf]
  %v73 = vld [vmem:[%s0 + $0xe8] sm:$0xf]
  %v74 = vld [vmem:[%s0 + $0xec] sm:$0xf]
  %v75 = vld [vmem:[%s0 + $0xf0] sm:$0xf]
  %v76 = vld [vmem:[%s0 + $0xf4] sm:$0xf]
  %v77 = vld [vmem:[%s0 + $0xf8] sm:$0xf]
  %v78 = vld [vmem:[%s0 + $0xfc] sm:$0xf]
  %v79 = vld [vmem:[%s1] sm:$0xf]
  %v80 = vld [vmem:[%s1 + $0x4] sm:$0xf]
  %v81 = vld [vmem:[%s1 + $0x8] sm:$0xf]
  %v82 = vld [vmem:[%s1 + $0xc] sm:$0xf]
  %v83 = vld [vmem:[%s1 + $0x10] sm:$0xf]
  %v84 = vld [vmem:[%s1 + $0x14] sm:$0xf]
  %v85 = vld [vmem:[%s1 + $0x18] sm:$0xf]
  %v86 = vld [vmem:[%s1 + $0x1c] sm:$0xf]
  %v87 = vld [vmem:[%s1 + $0x20] sm:$0xf]
  %v88 = vld [vmem:[%s2] sm:$0x1]
  %v90 = vlaneseq
  %v91 = vshrl.u32 %v90, 7
  %v92 = vsub.s32 0, %v91
  %v93 = vrot.slane %v88, %v92
  %v159 = vunpack.c.l.b16 %v15
  %v160 = vunpack.c.l.b16 %v16
  %v161 = vunpack.c.l.b16 %v17
  %v162 = vunpack.c.l.b16 %v18
  %v163 = vunpack.c.l.b16 %v19
  %v164 = vunpack.c.l.b16 %v20
  %v165 = vunpack.c.l.b16 %v21
  %v166 = vunpack.c.l.b16 %v22
  %v167 = vunpack.c.l.b16 %v23
  %v168 = vunpack.c.l.b16 %v24
  %v169 = vunpack.c.l.b16 %v25
  %v170 = vunpack.c.l.b16 %v26
  %v171 = vunpack.c.l.b16 %v27
  %v172 = vunpack.c.l.b16 %v28
  %v173 = vunpack.c.l.b16 %v29
  %v174 = vunpack.c.l.b16 %v30
  %v175 = vunpack.c.l.b16 %v31
  %v176 = vunpack.c.l.b16 %v32
  %v177 = vunpack.c.l.b16 %v33
  %v178 = vunpack.c.l.b16 %v34
  %v179 = vunpack.c.l.b16 %v35
  %v180 = vunpack.c.l.b16 %v36
  %v181 = vunpack.c.l.b16 %v37
  %v182 = vunpack.c.l.b16 %v38
  %v183 = vunpack.c.l.b16 %v39
  %v184 = vunpack.c.l.b16 %v40
  %v185 = vunpack.c.l.b16 %v41
  %v186 = vunpack.c.l.b16 %v42
  %v187 = vunpack.c.l.b16 %v43
  %v188 = vunpack.c.l.b16 %v44
  %v189 = vunpack.c.l.b16 %v45
  %v190 = vunpack.c.l.b16 %v46
  %v191 = vunpack.c.l.b16 %v47
  %v192 = vunpack.c.l.b16 %v48
  %v193 = vunpack.c.l.b16 %v49
  %v194 = vunpack.c.l.b16 %v50
  %v195 = vunpack.c.l.b16 %v51
  %v196 = vunpack.c.l.b16 %v52
  %v197 = vunpack.c.l.b16 %v53
  %v198 = vunpack.c.l.b16 %v54
  %v199 = vunpack.c.l.b16 %v55
  %v200 = vunpack.c.l.b16 %v56
  %v201 = vunpack.c.l.b16 %v57
  %v202 = vunpack.c.l.b16 %v58
  %v203 = vunpack.c.l.b16 %v59
  %v204 = vunpack.c.l.b16 %v60
  %v205 = vunpack.c.l.b16 %v61
  %v206 = vunpack.c.l.b16 %v62
  %v207 = vunpack.c.l.b16 %v63
  %v208 = vunpack.c.l.b16 %v64
  %v209 = vunpack.c.l.b16 %v65
  %v210 = vunpack.c.l.b16 %v66
  %v211 = vunpack.c.l.b16 %v67
  %v212 = vunpack.c.l.b16 %v68
  %v213 = vunpack.c.l.b16 %v69
  %v214 = vunpack.c.l.b16 %v70
  %v215 = vunpack.c.l.b16 %v71
  %v216 = vunpack.c.l.b16 %v72
  %v217 = vunpack.c.l.b16 %v73
  %v218 = vunpack.c.l.b16 %v74
  %v219 = vunpack.c.l.b16 %v75
  %v220 = vunpack.c.l.b16 %v76
  %v221 = vunpack.c.l.b16 %v77
  %v222 = vunpack.c.l.b16 %v78
  %v223 = vpack.c.b16 %v160, %v159
  %v224 = vpack.c.b16 %v162, %v161
  %v225 = vpack.c.b16 %v164, %v163
  %v226 = vpack.c.b16 %v166, %v165
  %v227 = vpack.c.b16 %v168, %v167
  %v228 = vpack.c.b16 %v170, %v169
  %v229 = vpack.c.b16 %v172, %v171
  %v230 = vpack.c.b16 %v174, %v173
  %v231 = vpack.c.b16 %v176, %v175
  %v232 = vpack.c.b16 %v178, %v177
  %v233 = vpack.c.b16 %v180, %v179
  %v234 = vpack.c.b16 %v182, %v181
  %v235 = vpack.c.b16 %v184, %v183
  %v236 = vpack.c.b16 %v186, %v185
  %v237 = vpack.c.b16 %v188, %v187
  %v238 = vpack.c.b16 %v190, %v189
  %v239 = vpack.c.b16 %v192, %v191
  %v240 = vpack.c.b16 %v194, %v193
  %v241 = vpack.c.b16 %v196, %v195
  %v242 = vpack.c.b16 %v198, %v197
  %v243 = vpack.c.b16 %v200, %v199
  %v244 = vpack.c.b16 %v202, %v201
  %v245 = vpack.c.b16 %v204, %v203
  %v246 = vpack.c.b16 %v206, %v205
  %v247 = vpack.c.b16 %v208, %v207
  %v248 = vpack.c.b16 %v210, %v209
  %v249 = vpack.c.b16 %v212, %v211
  %v250 = vpack.c.b16 %v214, %v213
  %v251 = vpack.c.b16 %v216, %v215
  %v252 = vpack.c.b16 %v218, %v217
  %v253 = vpack.c.b16 %v220, %v219
  %v254 = vpack.c.b16 %v222, %v221
  %v264 = vunpack.c.l.b16 %v79
  %v265 = vunpack.c.l.b16 %v80
  %v266 = vunpack.c.l.b16 %v81
  %v267 = vunpack.c.l.b16 %v82
  %v268 = vunpack.c.l.b16 %v83
  %v269 = vunpack.c.l.b16 %v84
  %v270 = vunpack.c.l.b16 %v85
  %v271 = vunpack.c.l.b16 %v86
  %v272 = vunpack.c.l.b16 %v87
  %v273 = vpack.c.b16 %v265, %v264
  %v274 = vpack.c.b16 %v267, %v266
  %v275 = vpack.c.b16 %v269, %v268
  %v276 = vpack.c.b16 %v271, %v270
  %v277 = vpack.c.b16 %v272, %v272
  %vm282 = vcmask 588800
  %v284 = vsel %vm282, %v223, 0
  %v287 = vsel %vm282, %v224, 0
  %v290 = vsel %vm282, %v225, 0
  %v293 = vsel %vm282, %v226, 0
  %v296 = vsel %vm282, %v227, 0
  %v299 = vsel %vm282, %v228, 0
  %v302 = vsel %vm282, %v229, 0
  %v305 = vsel %vm282, %v230, 0
  %v308 = vsel %vm282, %v231, 0
  %v311 = vsel %vm282, %v232, 0
  %v314 = vsel %vm282, %v233, 0
  %v317 = vsel %vm282, %v234, 0
  %v320 = vsel %vm282, %v235, 0
  %v323 = vsel %vm282, %v236, 0
  %v326 = vsel %vm282, %v237, 0
  %v329 = vsel %vm282, %v238, 0
  %v332 = vsel %vm282, %v239, 0
  %v335 = vsel %vm282, %v240, 0
  %v338 = vsel %vm282, %v241, 0
  %v341 = vsel %vm282, %v242, 0
  %v344 = vsel %vm282, %v243, 0
  %v347 = vsel %vm282, %v244, 0
  %v350 = vsel %vm282, %v245, 0
  %v353 = vsel %vm282, %v246, 0
  %v356 = vsel %vm282, %v247, 0
  %v359 = vsel %vm282, %v248, 0
  %v362 = vsel %vm282, %v249, 0
  %v365 = vsel %vm282, %v250, 0
  %v368 = vsel %vm282, %v251, 0
  %v371 = vsel %vm282, %v252, 0
  %v374 = vsel %vm282, %v253, 0
  %v377 = vsel %vm282, %v254, 0
  %vm379 = vcmask 1043456
  %v381 = vsel %vm379, %v277, 0
  %383 = vmatprep.subr.bf16.mxu0 0
  %384 = vmatpush1.bf16.msra.mxu0 %v273
  %385 = vmatprep.subr.bf16.mxu0 0
  %386 = vmatpush1.bf16.msra.mxu0 %v274
  %387 = vmatprep.subr.bf16.mxu0 0
  %388 = vmatpush1.bf16.msra.mxu0 %v275
  %389 = vmatprep.subr.bf16.mxu0 0
  %390 = vmatpush1.bf16.msra.mxu0 %v276
  %391 = vmatprep.subr.bf16.mxu0 0
  %392 = vmatpush1.bf16.msra.mxu0 %v381
  %393 = vmatprep.subr.bf16.mxu0 0
  %394 = vmatpush1.bf16.msra.mxu0 0
  %395 = vmatprep.subr.bf16.mxu0 0
  %396 = vmatpush1.bf16.msra.mxu0 0
  %397 = vmatprep.subr.bf16.mxu0 0
  %398 = vmatpush1.bf16.msra.mxu0 0
  %399 = vmatprep.subr.bf16.mxu0 0
  %400 = vmatpush1.bf16.msra.mxu0 0
  %401 = vmatprep.subr.bf16.mxu0 0
  %402 = vmatpush1.bf16.msra.mxu0 0
  %403 = vmatprep.subr.bf16.mxu0 0
  %404 = vmatpush1.bf16.msra.mxu0 0
  %405 = vmatprep.subr.bf16.mxu0 0
  %406 = vmatpush1.bf16.msra.mxu0 0
  %407 = vmatprep.subr.bf16.mxu0 0
  %408 = vmatpush1.bf16.msra.mxu0 0
  %409 = vmatprep.subr.bf16.mxu0 0
  %410 = vmatpush1.bf16.msra.mxu0 0
  %411 = vmatprep.subr.bf16.mxu0 0
  %412 = vmatpush1.bf16.msra.mxu0 0
  %413 = vmatprep.subr.bf16.mxu0 0
  %414 = vmatpush1.bf16.msra.mxu0 0
  %415 = vmatprep.mubr.bf16.mxu0 0
  %416 = vmatmul.mubr.bf16.gmra.mrb[0].mxu0 %v284
  %v417 = vpop.f32.mrb[0].mxu0
  %v418 = vadd.f32 %v93, %v417
  %v419 = vpop.f32.mrb[0].mxu0
  %v420 = vpop.f32.mrb[0].mxu0
  %v421 = vadd.f32 %v93, %v420
  %v422 = vpop.f32.mrb[0].mxu0
  %423 = vmatprep.mubr.bf16.mxu0 0
  %424 = vmatmul.mubr.bf16.gmra.mrb[0].mxu0 %v287
  %v425 = vpop.f32.mrb[0].mxu0
  %v426 = vadd.f32 %v93, %v425
  %v427 = vpop.f32.mrb[0].mxu0
  %v428 = vpop.f32.mrb[0].mxu0
  %v429 = vadd.f32 %v93, %v428
  %v430 = vpop.f32.mrb[0].mxu0
  %431 = vmatprep.mubr.bf16.mxu0 0
  %432 = vmatmul.mubr.bf16.gmra.mrb[0].mxu0 %v290
  %v433 = vpop.f32.mrb[0].mxu0
  %v434 = vadd.f32 %v93, %v433
  %v435 = vpop.f32.mrb[0].mxu0
  %v436 = vpop.f32.mrb[0].mxu0
  %v437 = vadd.f32 %v93, %v436
  %v438 = vpop.f32.mrb[0].mxu0
  %439 = vmatprep.mubr.bf16.mxu0 0
  %440 = vmatmul.mubr.bf16.gmra.mrb[0].mxu0 %v293
  %v441 = vpop.f32.mrb[0].mxu0
  %v442 = vadd.f32 %v93, %v441
  %v443 = vpop.f32.mrb[0].mxu0
  %v444 = vpop.f32.mrb[0].mxu0
  %v445 = vadd.f32 %v93, %v444
  %v446 = vpop.f32.mrb[0].mxu0
  %447 = vmatprep.mubr.bf16.mxu0 0
  %448 = vmatmul.mubr.bf16.gmra.mrb[0].mxu0 %v296
  %v449 = vpop.f32.mrb[0].mxu0
  %v450 = vadd.f32 %v93, %v449
  %v451 = vpop.f32.mrb[0].mxu0
  %v452 = vpop.f32.mrb[0].mxu0
  %v453 = vadd.f32 %v93, %v452
  %v454 = vpop.f32.mrb[0].mxu0
  %455 = vmatprep.mubr.bf16.mxu0 0
  %456 = vmatmul.mubr.bf16.gmra.mrb[0].mxu0 %v299
  %v457 = vpop.f32.mrb[0].mxu0
  %v458 = vadd.f32 %v93, %v457
  %v459 = vpop.f32.mrb[0].mxu0
  %v460 = vpop.f32.mrb[0].mxu0
  %v461 = vadd.f32 %v93, %v460
  %v462 = vpop.f32.mrb[0].mxu0
  %463 = vmatprep.mubr.bf16.mxu0 0
  %464 = vmatmul.mubr.bf16.gmra.mrb[0].mxu0 %v302
  %v465 = vpop.f32.mrb[0].mxu0
  %v466 = vadd.f32 %v93, %v465
  %v467 = vpop.f32.mrb[0].mxu0
  %v468 = vpop.f32.mrb[0].mxu0
  %v469 = vadd.f32 %v93, %v468
  %v470 = vpop.f32.mrb[0].mxu0
  %471 = vmatprep.mubr.bf16.mxu0 0
  %472 = vmatmul.mubr.bf16.gmra.mrb[0].mxu0 %v305
  %v473 = vpop.f32.mrb[0].mxu0
  %v474 = vadd.f32 %v93, %v473
  %v475 = vpop.f32.mrb[0].mxu0
  %v476 = vpop.f32.mrb[0].mxu0
  %v477 = vadd.f32 %v93, %v476
  %v478 = vpop.f32.mrb[0].mxu0
  %479 = vmatprep.mubr.bf16.mxu0 0
  %480 = vmatmul.mubr.bf16.gmra.mrb[0].mxu0 %v308
  %v481 = vpop.f32.mrb[0].mxu0
  %v482 = vadd.f32 %v93, %v481
  %v483 = vpop.f32.mrb[0].mxu0
  %v484 = vpop.f32.mrb[0].mxu0
  %v485 = vadd.f32 %v93, %v484
  %v486 = vpop.f32.mrb[0].mxu0
  %487 = vmatprep.mubr.bf16.mxu0 0
  %488 = vmatmul.mubr.bf16.gmra.mrb[0].mxu0 %v311
  %v489 = vpop.f32.mrb[0].mxu0
  %v490 = vadd.f32 %v93, %v489
  %v491 = vpop.f32.mrb[0].mxu0
  %v492 = vpop.f32.mrb[0].mxu0
  %v493 = vadd.f32 %v93, %v492
  %v494 = vpop.f32.mrb[0].mxu0
  %495 = vmatprep.mubr.bf16.mxu0 0
  %496 = vmatmul.mubr.bf16.gmra.mrb[0].mxu0 %v314
  %v497 = vpop.f32.mrb[0].mxu0
  %v498 = vadd.f32 %v93, %v497
  %v499 = vpop.f32.mrb[0].mxu0
  %v500 = vpop.f32.mrb[0].mxu0
  %v501 = vadd.f32 %v93, %v500
  %v502 = vpop.f32.mrb[0].mxu0
  %503 = vmatprep.mubr.bf16.mxu0 0
  %504 = vmatmul.mubr.bf16.gmra.mrb[0].mxu0 %v317
  %v505 = vpop.f32.mrb[0].mxu0
  %v506 = vadd.f32 %v93, %v505
  %v507 = vpop.f32.mrb[0].mxu0
  %v508 = vpop.f32.mrb[0].mxu0
  %v509 = vadd.f32 %v93, %v508
  %v510 = vpop.f32.mrb[0].mxu0
  %511 = vmatprep.mubr.bf16.mxu0 0
  %512 = vmatmul.mubr.bf16.gmra.mrb[0].mxu0 %v320
  %v513 = vpop.f32.mrb[0].mxu0
  %v514 = vadd.f32 %v93, %v513
  %v515 = vpop.f32.mrb[0].mxu0
  %v516 = vpop.f32.mrb[0].mxu0
  %v517 = vadd.f32 %v93, %v516
  %v518 = vpop.f32.mrb[0].mxu0
  %519 = vmatprep.mubr.bf16.mxu0 0
  %520 = vmatmul.mubr.bf16.gmra.mrb[0].mxu0 %v323
  %v521 = vpop.f32.mrb[0].mxu0
  %v522 = vadd.f32 %v93, %v521
  %v523 = vpop.f32.mrb[0].mxu0
  %v524 = vpop.f32.mrb[0].mxu0
  %v525 = vadd.f32 %v93, %v524
  %v526 = vpop.f32.mrb[0].mxu0
  %527 = vmatprep.mubr.bf16.mxu0 0
  %528 = vmatmul.mubr.bf16.gmra.mrb[0].mxu0 %v326
  %v529 = vpop.f32.mrb[0].mxu0
  %v530 = vadd.f32 %v93, %v529
  %v531 = vpop.f32.mrb[0].mxu0
  %v532 = vpop.f32.mrb[0].mxu0
  %v533 = vadd.f32 %v93, %v532
  %v534 = vpop.f32.mrb[0].mxu0
  %535 = vmatprep.mubr.bf16.mxu0 0
  %536 = vmatmul.mubr.bf16.gmra.mrb[0].mxu0 %v329
  %v537 = vpop.f32.mrb[0].mxu0
  %v538 = vadd.f32 %v93, %v537
  %v539 = vpop.f32.mrb[0].mxu0
  %v540 = vpop.f32.mrb[0].mxu0
  %v541 = vadd.f32 %v93, %v540
  %v542 = vpop.f32.mrb[0].mxu0
  %543 = vmatprep.mubr.bf16.mxu0 0
  %544 = vmatmul.mubr.bf16.gmra.mrb[0].mxu0 %v332
  %v545 = vpop.f32.mrb[0].mxu0
  %v546 = vadd.f32 %v93, %v545
  %v547 = vpop.f32.mrb[0].mxu0
  %v548 = vpop.f32.mrb[0].mxu0
  %v549 = vadd.f32 %v93, %v548
  %v550 = vpop.f32.mrb[0].mxu0
  %551 = vmatprep.mubr.bf16.mxu0 0
  %552 = vmatmul.mubr.bf16.gmra.mrb[0].mxu0 %v335
  %v553 = vpop.f32.mrb[0].mxu0
  %v554 = vadd.f32 %v93, %v553
  %v555 = vpop.f32.mrb[0].mxu0
  %v556 = vpop.f32.mrb[0].mxu0
  %v557 = vadd.f32 %v93, %v556
  %v558 = vpop.f32.mrb[0].mxu0
  %559 = vmatprep.mubr.bf16.mxu0 0
  %560 = vmatmul.mubr.bf16.gmra.mrb[0].mxu0 %v338
  %v561 = vpop.f32.mrb[0].mxu0
  %v562 = vadd.f32 %v93, %v561
  %v563 = vpop.f32.mrb[0].mxu0
  %v564 = vpop.f32.mrb[0].mxu0
  %v565 = vadd.f32 %v93, %v564
  %v566 = vpop.f32.mrb[0].mxu0
  %567 = vmatprep.mubr.bf16.mxu0 0
  %568 = vmatmul.mubr.bf16.gmra.mrb[0].mxu0 %v341
  %v569 = vpop.f32.mrb[0].mxu0
  %v570 = vadd.f32 %v93, %v569
  %v571 = vpop.f32.mrb[0].mxu0
  %v572 = vpop.f32.mrb[0].mxu0
  %v573 = vadd.f32 %v93, %v572
  %v574 = vpop.f32.mrb[0].mxu0
  %575 = vmatprep.mubr.bf16.mxu0 0
  %576 = vmatmul.mubr.bf16.gmra.mrb[0].mxu0 %v344
  %v577 = vpop.f32.mrb[0].mxu0
  %v578 = vadd.f32 %v93, %v577
  %v579 = vpop.f32.mrb[0].mxu0
  %v580 = vpop.f32.mrb[0].mxu0
  %v581 = vadd.f32 %v93, %v580
  %v582 = vpop.f32.mrb[0].mxu0
  %583 = vmatprep.mubr.bf16.mxu0 0
  %584 = vmatmul.mubr.bf16.gmra.mrb[0].mxu0 %v347
  %v585 = vpop.f32.mrb[0].mxu0
  %v586 = vadd.f32 %v93, %v585
  %v587 = vpop.f32.mrb[0].mxu0
  %v588 = vpop.f32.mrb[0].mxu0
  %v589 = vadd.f32 %v93, %v588
  %v590 = vpop.f32.mrb[0].mxu0
  %591 = vmatprep.mubr.bf16.mxu0 0
  %592 = vmatmul.mubr.bf16.gmra.mrb[0].mxu0 %v350
  %v593 = vpop.f32.mrb[0].mxu0
  %v594 = vadd.f32 %v93, %v593
  %v595 = vpop.f32.mrb[0].mxu0
  %v596 = vpop.f32.mrb[0].mxu0
  %v597 = vadd.f32 %v93, %v596
  %v598 = vpop.f32.mrb[0].mxu0
  %599 = vmatprep.mubr.bf16.mxu0 0
  %600 = vmatmul.mubr.bf16.gmra.mrb[0].mxu0 %v353
  %v601 = vpop.f32.mrb[0].mxu0
  %v602 = vadd.f32 %v93, %v601
  %v603 = vpop.f32.mrb[0].mxu0
  %v604 = vpop.f32.mrb[0].mxu0
  %v605 = vadd.f32 %v93, %v604
  %v606 = vpop.f32.mrb[0].mxu0
  %607 = vmatprep.mubr.bf16.mxu0 0
  %608 = vmatmul.mubr.bf16.gmra.mrb[0].mxu0 %v356
  %v609 = vpop.f32.mrb[0].mxu0
  %v610 = vadd.f32 %v93, %v609
  %v611 = vpop.f32.mrb[0].mxu0
  %v612 = vpop.f32.mrb[0].mxu0
  %v613 = vadd.f32 %v93, %v612
  %v614 = vpop.f32.mrb[0].mxu0
  %615 = vmatprep.mubr.bf16.mxu0 0
  %616 = vmatmul.mubr.bf16.gmra.mrb[0].mxu0 %v359
  %v617 = vpop.f32.mrb[0].mxu0
  %v618 = vadd.f32 %v93, %v617
  %v619 = vpop.f32.mrb[0].mxu0
  %v620 = vpop.f32.mrb[0].mxu0
  %v621 = vadd.f32 %v93, %v620
  %v622 = vpop.f32.mrb[0].mxu0
  %623 = vmatprep.mubr.bf16.mxu0 0
  %624 = vmatmul.mubr.bf16.gmra.mrb[0].mxu0 %v362
  %v625 = vpop.f32.mrb[0].mxu0
  %v626 = vadd.f32 %v93, %v625
  %v627 = vpop.f32.mrb[0].mxu0
  %v628 = vpop.f32.mrb[0].mxu0
  %v629 = vadd.f32 %v93, %v628
  %v630 = vpop.f32.mrb[0].mxu0
  %631 = vmatprep.mubr.bf16.mxu0 0
  %632 = vmatmul.mubr.bf16.gmra.mrb[0].mxu0 %v365
  %v633 = vpop.f32.mrb[0].mxu0
  %v634 = vadd.f32 %v93, %v633
  %v635 = vpop.f32.mrb[0].mxu0
  %v636 = vpop.f32.mrb[0].mxu0
  %v637 = vadd.f32 %v93, %v636
  %v638 = vpop.f32.mrb[0].mxu0
  %639 = vmatprep.mubr.bf16.mxu0 0
  %640 = vmatmul.mubr.bf16.gmra.mrb[0].mxu0 %v368
  %v641 = vpop.f32.mrb[0].mxu0
  %v642 = vadd.f32 %v93, %v641
  %v643 = vpop.f32.mrb[0].mxu0
  %v644 = vpop.f32.mrb[0].mxu0
  %v645 = vadd.f32 %v93, %v644
  %v646 = vpop.f32.mrb[0].mxu0
  %647 = vmatprep.mubr.bf16.mxu0 0
  %648 = vmatmul.mubr.bf16.gmra.mrb[0].mxu0 %v371
  %v649 = vpop.f32.mrb[0].mxu0
  %v650 = vadd.f32 %v93, %v649
  %v651 = vpop.f32.mrb[0].mxu0
  %v652 = vpop.f32.mrb[0].mxu0
  %v653 = vadd.f32 %v93, %v652
  %v654 = vpop.f32.mrb[0].mxu0
  %655 = vmatprep.mubr.bf16.mxu0 0
  %656 = vmatmul.mubr.bf16.gmra.mrb[0].mxu0 %v374
  %v657 = vpop.f32.mrb[0].mxu0
  %v658 = vadd.f32 %v93, %v657
  %v659 = vpop.f32.mrb[0].mxu0
  %v660 = vpop.f32.mrb[0].mxu0
  %v661 = vadd.f32 %v93, %v660
  %v662 = vpop.f32.mrb[0].mxu0
  %663 = vmatprep.mubr.bf16.mxu0 0
  %664 = vmatmul.mubr.bf16.gmra.mrb[0].mxu0 %v377
  %v665 = vpop.f32.mrb[0].mxu0
  %v666 = vadd.f32 %v93, %v665
  %v667 = vpop.f32.mrb[0].mxu0
  %v668 = vpop.f32.mrb[0].mxu0
  %v669 = vadd.f32 %v93, %v668
  %v670 = vpop.f32.mrb[0].mxu0
  %671 = vdwg.mxu0
  %v672 = vmax.f32 %v418, 0.0
  %v673 = vmax.f32 %v421, 0.0
  %v674 = vmax.f32 %v426, 0.0
  %v675 = vmax.f32 %v429, 0.0
  %v676 = vmax.f32 %v434, 0.0
  %v677 = vmax.f32 %v437, 0.0
  %v678 = vmax.f32 %v442, 0.0
  %v679 = vmax.f32 %v445, 0.0
  %v680 = vmax.f32 %v450, 0.0
  %v681 = vmax.f32 %v453, 0.0
  %v682 = vmax.f32 %v458, 0.0
  %v683 = vmax.f32 %v461, 0.0
  %v684 = vmax.f32 %v466, 0.0
  %v685 = vmax.f32 %v469, 0.0
  %v686 = vmax.f32 %v474, 0.0
  %v687 = vmax.f32 %v477, 0.0
  %v688 = vmax.f32 %v482, 0.0
  %v689 = vmax.f32 %v485, 0.0
  %v690 = vmax.f32 %v490, 0.0
  %v691 = vmax.f32 %v493, 0.0
  %v692 = vmax.f32 %v498, 0.0
  %v693 = vmax.f32 %v501, 0.0
  %v694 = vmax.f32 %v506, 0.0
  %v695 = vmax.f32 %v509, 0.0
  %v696 = vmax.f32 %v514, 0.0
  %v697 = vmax.f32 %v517, 0.0
  %v698 = vmax.f32 %v522, 0.0
  %v699 = vmax.f32 %v525, 0.0
  %v700 = vmax.f32 %v530, 0.0
  %v701 = vmax.f32 %v533, 0.0
  %v702 = vmax.f32 %v538, 0.0
  %v703 = vmax.f32 %v541, 0.0
  %v704 = vmax.f32 %v546, 0.0
  %v705 = vmax.f32 %v549, 0.0
  %v706 = vmax.f32 %v554, 0.0
  %v707 = vmax.f32 %v557, 0.0
  %v708 = vmax.f32 %v562, 0.0
  %v709 = vmax.f32 %v565, 0.0
  %v710 = vmax.f32 %v570, 0.0
  %v711 = vmax.f32 %v573, 0.0
  %v712 = vmax.f32 %v578, 0.0
  %v713 = vmax.f32 %v581, 0.0
  %v714 = vmax.f32 %v586, 0.0
  %v715 = vmax.f32 %v589, 0.0
  %v716 = vmax.f32 %v594, 0.0
  %v717 = vmax.f32 %v597, 0.0
  %v718 = vmax.f32 %v602, 0.0
  %v719 = vmax.f32 %v605, 0.0
  %v720 = vmax.f32 %v610, 0.0
  %v721 = vmax.f32 %v613, 0.0
  %v722 = vmax.f32 %v618, 0.0
  %v723 = vmax.f32 %v621, 0.0
  %v724 = vmax.f32 %v626, 0.0
  %v725 = vmax.f32 %v629, 0.0
  %v726 = vmax.f32 %v634, 0.0
  %v727 = vmax.f32 %v637, 0.0
  %v728 = vmax.f32 %v642, 0.0
  %v729 = vmax.f32 %v645, 0.0
  %v730 = vmax.f32 %v650, 0.0
  %v731 = vmax.f32 %v653, 0.0
  %v732 = vmax.f32 %v658, 0.0
  %v733 = vmax.f32 %v661, 0.0
  %v734 = vmax.f32 %v666, 0.0
  %v735 = vmax.f32 %v669, 0.0
  %vm736 = vcmask 64512
  %737 = vst.msk [vmem:[%s3] sm:$0xff] %vm736, %v672
  %738 = vst.msk [vmem:[%s3 + $0x8] sm:$0xff] %vm736, %v673
  %739 = vst.msk [vmem:[%s3 + $0x10] sm:$0xff] %vm736, %v674
  %740 = vst.msk [vmem:[%s3 + $0x18] sm:$0xff] %vm736, %v675
  %741 = vst.msk [vmem:[%s3 + $0x20] sm:$0xff] %vm736, %v676
  %742 = vst.msk [vmem:[%s3 + $0x28] sm:$0xff] %vm736, %v677
  %743 = vst.msk [vmem:[%s3 + $0x30] sm:$0xff] %vm736, %v678
  %744 = vst.msk [vmem:[%s3 + $0x38] sm:$0xff] %vm736, %v679
  %745 = vst.msk [vmem:[%s3 + $0x40] sm:$0xff] %vm736, %v680
  %746 = vst.msk [vmem:[%s3 + $0x48] sm:$0xff] %vm736, %v681
  %747 = vst.msk [vmem:[%s3 + $0x50] sm:$0xff] %vm736, %v682
  %748 = vst.msk [vmem:[%s3 + $0x58] sm:$0xff] %vm736, %v683
  %749 = vst.msk [vmem:[%s3 + $0x60] sm:$0xff] %vm736, %v684
  %750 = vst.msk [vmem:[%s3 + $0x68] sm:$0xff] %vm736, %v685
  %751 = vst.msk [vmem:[%s3 + $0x70] sm:$0xff] %vm736, %v686
  %752 = vst.msk [vmem:[%s3 + $0x78] sm:$0xff] %vm736, %v687
  %753 = vst.msk [vmem:[%s3 + $0x80] sm:$0xff] %vm736, %v688
  %754 = vst.msk [vmem:[%s3 + $0x88] sm:$0xff] %vm736, %v689
  %755 = vst.msk [vmem:[%s3 + $0x90] sm:$0xff] %vm736, %v690
  %756 = vst.msk [vmem:[%s3 + $0x98] sm:$0xff] %vm736, %v691
  %757 = vst.msk [vmem:[%s3 + $0xa0] sm:$0xff] %vm736, %v692
  %758 = vst.msk [vmem:[%s3 + $0xa8] sm:$0xff] %vm736, %v693
  %759 = vst.msk [vmem:[%s3 + $0xb0] sm:$0xff] %vm736, %v694
  %760 = vst.msk [vmem:[%s3 + $0xb8] sm:$0xff] %vm736, %v695
  %761 = vst.msk [vmem:[%s3 + $0xc0] sm:$0xff] %vm736, %v696
  %762 = vst.msk [vmem:[%s3 + $0xc8] sm:$0xff] %vm736, %v697
  %763 = vst.msk [vmem:[%s3 + $0xd0] sm:$0xff] %vm736, %v698
  %764 = vst.msk [vmem:[%s3 + $0xd8] sm:$0xff] %vm736, %v699
  %765 = vst.msk [vmem:[%s3 + $0xe0] sm:$0xff] %vm736, %v700
  %766 = vst.msk [vmem:[%s3 + $0xe8] sm:$0xff] %vm736, %v701
  %767 = vst.msk [vmem:[%s3 + $0xf0] sm:$0xff] %vm736, %v702
  %768 = vst.msk [vmem:[%s3 + $0xf8] sm:$0xff] %vm736, %v703
  %769 = vst.msk [vmem:[%s3 + $0x100] sm:$0xff] %vm736, %v704
  %770 = vst.msk [vmem:[%s3 + $0x108] sm:$0xff] %vm736, %v705
  %771 = vst.msk [vmem:[%s3 + $0x110] sm:$0xff] %vm736, %v706
  %772 = vst.msk [vmem:[%s3 + $0x118] sm:$0xff] %vm736, %v707
  %773 = vst.msk [vmem:[%s3 + $0x120] sm:$0xff] %vm736, %v708
  %774 = vst.msk [vmem:[%s3 + $0x128] sm:$0xff] %vm736, %v709
  %775 = vst.msk [vmem:[%s3 + $0x130] sm:$0xff] %vm736, %v710
  %776 = vst.msk [vmem:[%s3 + $0x138] sm:$0xff] %vm736, %v711
  %777 = vst.msk [vmem:[%s3 + $0x140] sm:$0xff] %vm736, %v712
  %778 = vst.msk [vmem:[%s3 + $0x148] sm:$0xff] %vm736, %v713
  %779 = vst.msk [vmem:[%s3 + $0x150] sm:$0xff] %vm736, %v714
  %780 = vst.msk [vmem:[%s3 + $0x158] sm:$0xff] %vm736, %v715
  %781 = vst.msk [vmem:[%s3 + $0x160] sm:$0xff] %vm736, %v716
  %782 = vst.msk [vmem:[%s3 + $0x168] sm:$0xff] %vm736, %v717
  %783 = vst.msk [vmem:[%s3 + $0x170] sm:$0xff] %vm736, %v718
  %784 = vst.msk [vmem:[%s3 + $0x178] sm:$0xff] %vm736, %v719
  %785 = vst.msk [vmem:[%s3 + $0x180] sm:$0xff] %vm736, %v720
  %786 = vst.msk [vmem:[%s3 + $0x188] sm:$0xff] %vm736, %v721
  %787 = vst.msk [vmem:[%s3 + $0x190] sm:$0xff] %vm736, %v722
  %788 = vst.msk [vmem:[%s3 + $0x198] sm:$0xff] %vm736, %v723
  %789 = vst.msk [vmem:[%s3 + $0x1a0] sm:$0xff] %vm736, %v724
  %790 = vst.msk [vmem:[%s3 + $0x1a8] sm:$0xff] %vm736, %v725
  %791 = vst.msk [vmem:[%s3 + $0x1b0] sm:$0xff] %vm736, %v726
  %792 = vst.msk [vmem:[%s3 + $0x1b8] sm:$0xff] %vm736, %v727
  %793 = vst.msk [vmem:[%s3 + $0x1c0] sm:$0xff] %vm736, %v728
  %794 = vst.msk [vmem:[%s3 + $0x1c8] sm:$0xff] %vm736, %v729
  %795 = vst.msk [vmem:[%s3 + $0x1d0] sm:$0xff] %vm736, %v730
  %796 = vst.msk [vmem:[%s3 + $0x1d8] sm:$0xff] %vm736, %v731
  %797 = vst.msk [vmem:[%s3 + $0x1e0] sm:$0xff] %vm736, %v732
  %798 = vst.msk [vmem:[%s3 + $0x1e8] sm:$0xff] %vm736, %v733
  %799 = vst.msk [vmem:[%s3 + $0x1f0] sm:$0xff] %vm736, %v734
  %800 = vst.msk [vmem:[%s3 + $0x1f8] sm:$0xff] %vm736, %v735
  // Predicated region
  $region14: #{_lambda_.4} parent=0 // pred_check
    _
  $region15: #{_lambda_.4} parent=0 // pred_check_branch
    %802 = sbr.rel (0) target = $region17
  $region16: #{_lambda_.4} parent=0 // pred_region
    _
  $region17: #{_lambda_.4} parent=0 // pred_fallthru
    _
  // Predicated region
  $region18: #{_lambda_.4} parent=0 // pred_check
    _
  $region19: #{_lambda_.4} parent=0 // pred_check_branch
    %804 = sbr.rel (0) target = $region21
  $region20: #{_lambda_.4} parent=0 // pred_region
    _
  $region21: #{_lambda_.4} parent=0 // pred_fallthru
    _

// kernel: _lambda_.5
$region0: #{_lambda_.5}
  #allocation0 [shape = 'u32[]', space=smem, size = 0x4, offset = 0x4, fixed_abs, tag = 'smem constant byte address 0x4 - core index']
  #allocation1 [shape = 'u32[144,128]{1,0:T(1,128)}', space=vmem, size = 0x12000, scoped, tag = 'internal scratch']
  %s0 = inlined_call_operand.vmem [shape: bf16[512,8], index: 0, kind: input, shape index: {}]
  %s1 = inlined_call_operand.vmem [shape: bf16[8,32], index: 1, kind: input, shape index: {}]
  %s2 = inlined_call_operand.vmem [shape: f32[1,32], index: 2, kind: input, shape index: {}]
  %s3 = inlined_call_operand.vmem [shape: bf16[512,32], index: 3, kind: input, shape index: {}]
  %s4 = inlined_call_operand.hbm [shape: f32[512,32], index: 4, kind: output, shape index: {}]
  %s5 = sld [smem:[#allocation0]]
  $region26: #{_lambda_.5} parent=0
    _
  %s7 = ssub.s32 1, %s5
  %s8 = scalar_select 0, %s7, %s5
  $region1: #{_lambda_.5} parent=0
    #allocation2 [shape = 'u8[262144]{0}', space=vmem, size = 0x40000, scoped, tag = 'output window, operand 0, single buffered']
    #allocation3 [shape = 's32[1]{0}', space=sflag, size = 0x4, scoped, tag = 'scoped memory for _lambda_.5']
    %9 = vsyncpa [#allocation3], 0
    // Predicated region
    $region2: #{_lambda_.5} parent=1 // pred_check
      _
    $region3: #{_lambda_.5} parent=1 // pred_check_branch
      %11 = sbr.rel (0) target = $region5
    $region4: #{_lambda_.5} parent=1 // pred_region
      _
    $region5: #{_lambda_.5} parent=1 // pred_fallthru
      _
    // Predicated region
    $region6: #{_lambda_.5} parent=1 // pred_check
      _
    $region7: #{_lambda_.5} parent=1 // pred_check_branch
      %13 = sbr.rel (0) target = $region9
    $region8: #{_lambda_.5} parent=1 // pred_region
      _
    $region9: #{_lambda_.5} parent=1 // pred_fallthru
      _
    // Predicated region
    $region10: #{_lambda_.5} parent=1 // pred_check
      _
    $region11: #{_lambda_.5} parent=1 // pred_check_branch
      %15 = sbr.rel (0) target = $region13
    $region12: #{_lambda_.5} parent=1 // pred_region
      _
    $region13: #{_lambda_.5} parent=1 // pred_fallthru
      _
    // Predicated region
    $region14: #{_lambda_.5} parent=1 // pred_check
      _
    $region15: #{_lambda_.5} parent=1 // pred_check_branch
      %17 = sbr.rel (0) target = $region17
    $region16: #{_lambda_.5} parent=1 // pred_region
      _
    $region17: #{_lambda_.5} parent=1 // pred_fallthru
      _
    %v19 = vld [vmem:[%s0] sm:$0xf]
    %v20 = vld [vmem:[%s0 + $0x4] sm:$0xf]
    %v21 = vld [vmem:[%s0 + $0x8] sm:$0xf]
    %v22 = vld [vmem:[%s0 + $0xc] sm:$0xf]
    %v23 = vld [vmem:[%s0 + $0x10] sm:$0xf]
    %v24 = vld [vmem:[%s0 + $0x14] sm:$0xf]
    %v25 = vld [vmem:[%s0 + $0x18] sm:$0xf]
    %v26 = vld [vmem:[%s0 + $0x1c] sm:$0xf]
    %v27 = vld [vmem:[%s0 + $0x20] sm:$0xf]
    %v28 = vld [vmem:[%s0 + $0x24] sm:$0xf]
    %v29 = vld [vmem:[%s0 + $0x28] sm:$0xf]
    %v30 = vld [vmem:[%s0 + $0x2c] sm:$0xf]
    %v31 = vld [vmem:[%s0 + $0x30] sm:$0xf]
    %v32 = vld [vmem:[%s0 + $0x34] sm:$0xf]
    %v33 = vld [vmem:[%s0 + $0x38] sm:$0xf]
    %v34 = vld [vmem:[%s0 + $0x3c] sm:$0xf]
    %v35 = vld [vmem:[%s0 + $0x40] sm:$0xf]
    %v36 = vld [vmem:[%s0 + $0x44] sm:$0xf]
    %v37 = vld [vmem:[%s0 + $0x48] sm:$0xf]
    %v38 = vld [vmem:[%s0 + $0x4c] sm:$0xf]
    %v39 = vld [vmem:[%s0 + $0x50] sm:$0xf]
    %v40 = vld [vmem:[%s0 + $0x54] sm:$0xf]
    %v41 = vld [vmem:[%s0 + $0x58] sm:$0xf]
    %v42 = vld [vmem:[%s0 + $0x5c] sm:$0xf]
    %v43 = vld [vmem:[%s0 + $0x60] sm:$0xf]
    %v44 = vld [vmem:[%s0 + $0x64] sm:$0xf]
    %v45 = vld [vmem:[%s0 + $0x68] sm:$0xf]
    %v46 = vld [vmem:[%s0 + $0x6c] sm:$0xf]
    %v47 = vld [vmem:[%s0 + $0x70] sm:$0xf]
    %v48 = vld [vmem:[%s0 + $0x74] sm:$0xf]
    %v49 = vld [vmem:[%s0 + $0x78] sm:$0xf]
    %v50 = vld [vmem:[%s0 + $0x7c] sm:$0xf]
    %v51 = vld [vmem:[%s0 + $0x80] sm:$0xf]
    %v52 = vld [vmem:[%s0 + $0x84] sm:$0xf]
    %v53 = vld [vmem:[%s0 + $0x88] sm:$0xf]
    %v54 = vld [vmem:[%s0 + $0x8c] sm:$0xf]
    %v55 = vld [vmem:[%s0 + $0x90] sm:$0xf]
    %v56 = vld [vmem:[%s0 + $0x94] sm:$0xf]
    %v57 = vld [vmem:[%s0 + $0x98] sm:$0xf]
    %v58 = vld [vmem:[%s0 + $0x9c] sm:$0xf]
    %v59 = vld [vmem:[%s0 + $0xa0] sm:$0xf]
    %v60 = vld [vmem:[%s0 + $0xa4] sm:$0xf]
    %v61 = vld [vmem:[%s0 + $0xa8] sm:$0xf]
    %v62 = vld [vmem:[%s0 + $0xac] sm:$0xf]
    %v63 = vld [vmem:[%s0 + $0xb0] sm:$0xf]
    %v64 = vld [vmem:[%s0 + $0xb4] sm:$0xf]
    %v65 = vld [vmem:[%s0 + $0xb8] sm:$0xf]
    %v66 = vld [vmem:[%s0 + $0xbc] sm:$0xf]
    %v67 = vld [vmem:[%s0 + $0xc0] sm:$0xf]
    %v68 = vld [vmem:[%s0 + $0xc4] sm:$0xf]
    %v69 = vld [vmem:[%s0 + $0xc8] sm:$0xf]
    %v70 = vld [vmem:[%s0 + $0xcc] sm:$0xf]
    %v71 = vld [vmem:[%s0 + $0xd0] sm:$0xf]
    %v72 = vld [vmem:[%s0 + $0xd4] sm:$0xf]
    %v73 = vld [vmem:[%s0 + $0xd8] sm:$0xf]
    %v74 = vld [vmem:[%s0 + $0xdc] sm:$0xf]
    %v75 = vld [vmem:[%s0 + $0xe0] sm:$0xf]
    %v76 = vld [vmem:[%s0 + $0xe4] sm:$0xf]
    %v77 = vld [vmem:[%s0 + $0xe8] sm:$0xf]
    %v78 = vld [vmem:[%s0 + $0xec] sm:$0xf]
    %v79 = vld [vmem:[%s0 + $0xf0] sm:$0xf]
    %v80 = vld [vmem:[%s0 + $0xf4] sm:$0xf]
    %v81 = vld [vmem:[%s0 + $0xf8] sm:$0xf]
    %v82 = vld [vmem:[%s0 + $0xfc] sm:$0xf]
    %v83 = vld [vmem:[%s1] sm:$0xf]
    %v84 = vld [vmem:[%s2] sm:$0x1]
    %v86 = vlaneseq
    %v87 = vshrl.u32 %v86, 7
    %v88 = vsub.s32 0, %v87
    %v89 = vrot.slane %v84, %v88
    %v155 = vunpack.c.l.b16 %v19
    %v156 = vunpack.c.l.b16 %v20
    %v157 = vunpack.c.l.b16 %v21
    %v158 = vunpack.c.l.b16 %v22
    %v159 = vunpack.c.l.b16 %v23
    %v160 = vunpack.c.l.b16 %v24
    %v161 = vunpack.c.l.b16 %v25
    %v162 = vunpack.c.l.b16 %v26
    %v163 = vunpack.c.l.b16 %v27
    %v164 = vunpack.c.l.b16 %v28
    %v165 = vunpack.c.l.b16 %v29
    %v166 = vunpack.c.l.b16 %v30
    %v167 = vunpack.c.l.b16 %v31
    %v168 = vunpack.c.l.b16 %v32
    %v169 = vunpack.c.l.b16 %v33
    %v170 = vunpack.c.l.b16 %v34
    %v171 = vunpack.c.l.b16 %v35
    %v172 = vunpack.c.l.b16 %v36
    %v173 = vunpack.c.l.b16 %v37
    %v174 = vunpack.c.l.b16 %v38
    %v175 = vunpack.c.l.b16 %v39
    %v176 = vunpack.c.l.b16 %v40
    %v177 = vunpack.c.l.b16 %v41
    %v178 = vunpack.c.l.b16 %v42
    %v179 = vunpack.c.l.b16 %v43
    %v180 = vunpack.c.l.b16 %v44
    %v181 = vunpack.c.l.b16 %v45
    %v182 = vunpack.c.l.b16 %v46
    %v183 = vunpack.c.l.b16 %v47
    %v184 = vunpack.c.l.b16 %v48
    %v185 = vunpack.c.l.b16 %v49
    %v186 = vunpack.c.l.b16 %v50
    %v187 = vunpack.c.l.b16 %v51
    %v188 = vunpack.c.l.b16 %v52
    %v189 = vunpack.c.l.b16 %v53
    %v190 = vunpack.c.l.b16 %v54
    %v191 = vunpack.c.l.b16 %v55
    %v192 = vunpack.c.l.b16 %v56
    %v193 = vunpack.c.l.b16 %v57
    %v194 = vunpack.c.l.b16 %v58
    %v195 = vunpack.c.l.b16 %v59
    %v196 = vunpack.c.l.b16 %v60
    %v197 = vunpack.c.l.b16 %v61
    %v198 = vunpack.c.l.b16 %v62
    %v199 = vunpack.c.l.b16 %v63
    %v200 = vunpack.c.l.b16 %v64
    %v201 = vunpack.c.l.b16 %v65
    %v202 = vunpack.c.l.b16 %v66
    %v203 = vunpack.c.l.b16 %v67
    %v204 = vunpack.c.l.b16 %v68
    %v205 = vunpack.c.l.b16 %v69
    %v206 = vunpack.c.l.b16 %v70
    %v207 = vunpack.c.l.b16 %v71
    %v208 = vunpack.c.l.b16 %v72
    %v209 = vunpack.c.l.b16 %v73
    %v210 = vunpack.c.l.b16 %v74
    %v211 = vunpack.c.l.b16 %v75
    %v212 = vunpack.c.l.b16 %v76
    %v213 = vunpack.c.l.b16 %v77
    %v214 = vunpack.c.l.b16 %v78
    %v215 = vunpack.c.l.b16 %v79
    %v216 = vunpack.c.l.b16 %v80
    %v217 = vunpack.c.l.b16 %v81
    %v218 = vunpack.c.l.b16 %v82
    %v219 = vpack.c.b16 %v156, %v155
    %v220 = vpack.c.b16 %v158, %v157
    %v221 = vpack.c.b16 %v160, %v159
    %v222 = vpack.c.b16 %v162, %v161
    %v223 = vpack.c.b16 %v164, %v163
    %v224 = vpack.c.b16 %v166, %v165
    %v225 = vpack.c.b16 %v168, %v167
    %v226 = vpack.c.b16 %v170, %v169
    %v227 = vpack.c.b16 %v172, %v171
    %v228 = vpack.c.b16 %v174, %v173
    %v229 = vpack.c.b16 %v176, %v175
    %v230 = vpack.c.b16 %v178, %v177
    %v231 = vpack.c.b16 %v180, %v179
    %v232 = vpack.c.b16 %v182, %v181
    %v233 = vpack.c.b16 %v184, %v183
    %v234 = vpack.c.b16 %v186, %v185
    %v235 = vpack.c.b16 %v188, %v187
    %v236 = vpack.c.b16 %v190, %v189
    %v237 = vpack.c.b16 %v192, %v191
    %v238 = vpack.c.b16 %v194, %v193
    %v239 = vpack.c.b16 %v196, %v195
    %v240 = vpack.c.b16 %v198, %v197
    %v241 = vpack.c.b16 %v200, %v199
    %v242 = vpack.c.b16 %v202, %v201
    %v243 = vpack.c.b16 %v204, %v203
    %v244 = vpack.c.b16 %v206, %v205
    %v245 = vpack.c.b16 %v208, %v207
    %v246 = vpack.c.b16 %v210, %v209
    %v247 = vpack.c.b16 %v212, %v211
    %v248 = vpack.c.b16 %v214, %v213
    %v249 = vpack.c.b16 %v216, %v215
    %v250 = vpack.c.b16 %v218, %v217
    %vm251 = vcmask 64512
    %v253 = vsel %vm251, %v219, 0
    %v256 = vsel %vm251, %v220, 0
    %v259 = vsel %vm251, %v221, 0
    %v262 = vsel %vm251, %v222, 0
    %v265 = vsel %vm251, %v223, 0
    %v268 = vsel %vm251, %v224, 0
    %v271 = vsel %vm251, %v225, 0
    %v274 = vsel %vm251, %v226, 0
    %v277 = vsel %vm251, %v227, 0
    %v280 = vsel %vm251, %v228, 0
    %v283 = vsel %vm251, %v229, 0
    %v286 = vsel %vm251, %v230, 0
    %v289 = vsel %vm251, %v231, 0
    %v292 = vsel %vm251, %v232, 0
    %v295 = vsel %vm251, %v233, 0
    %v298 = vsel %vm251, %v234, 0
    %v301 = vsel %vm251, %v235, 0
    %v304 = vsel %vm251, %v236, 0
    %v307 = vsel %vm251, %v237, 0
    %v310 = vsel %vm251, %v238, 0
    %v313 = vsel %vm251, %v239, 0
    %v316 = vsel %vm251, %v240, 0
    %v319 = vsel %vm251, %v241, 0
    %v322 = vsel %vm251, %v242, 0
    %v325 = vsel %vm251, %v243, 0
    %v328 = vsel %vm251, %v244, 0
    %v331 = vsel %vm251, %v245, 0
    %v334 = vsel %vm251, %v246, 0
    %v337 = vsel %vm251, %v247, 0
    %v340 = vsel %vm251, %v248, 0
    %v343 = vsel %vm251, %v249, 0
    %v346 = vsel %vm251, %v250, 0
    %vm348 = vcmask 1043456
    %v350 = vsel %vm348, %v83, 0
    %352 = vmatprep.subr.bf16.mxu0 0
    %353 = vmatpush1.bf16.msra.mxu0 %v350
    %354 = vmatprep.subr.bf16.mxu0 0
    %355 = vmatpush1.bf16.msra.mxu0 0
    %356 = vmatprep.subr.bf16.mxu0 0
    %357 = vmatpush1.bf16.msra.mxu0 0
    %358 = vmatprep.subr.bf16.mxu0 0
    %359 = vmatpush1.bf16.msra.mxu0 0
    %360 = vmatprep.subr.bf16.mxu0 0
    %361 = vmatpush1.bf16.msra.mxu0 0
    %362 = vmatprep.subr.bf16.mxu0 0
    %363 = vmatpush1.bf16.msra.mxu0 0
    %364 = vmatprep.subr.bf16.mxu0 0
    %365 = vmatpush1.bf16.msra.mxu0 0
    %366 = vmatprep.subr.bf16.mxu0 0
    %367 = vmatpush1.bf16.msra.mxu0 0
    %368 = vmatprep.subr.bf16.mxu0 0
    %369 = vmatpush1.bf16.msra.mxu0 0
    %370 = vmatprep.subr.bf16.mxu0 0
    %371 = vmatpush1.bf16.msra.mxu0 0
    %372 = vmatprep.subr.bf16.mxu0 0
    %373 = vmatpush1.bf16.msra.mxu0 0
    %374 = vmatprep.subr.bf16.mxu0 0
    %375 = vmatpush1.bf16.msra.mxu0 0
    %376 = vmatprep.subr.bf16.mxu0 0
    %377 = vmatpush1.bf16.msra.mxu0 0
    %378 = vmatprep.subr.bf16.mxu0 0
    %379 = vmatpush1.bf16.msra.mxu0 0
    %380 = vmatprep.subr.bf16.mxu0 0
    %381 = vmatpush1.bf16.msra.mxu0 0
    %382 = vmatprep.subr.bf16.mxu0 0
    %383 = vmatpush1.bf16.msra.mxu0 0
    %384 = vmatprep.mubr.bf16.mxu0 0
    %385 = vmatmul.mubr.bf16.gmra.mrb[0].mxu0 %v253
    %v386 = vpop.f32.mrb[0].mxu0
    %v387 = vadd.f32 %v89, %v386
    %v388 = vpop.f32.mrb[0].mxu0
    %v389 = vpop.f32.mrb[0].mxu0
    %v390 = vadd.f32 %v89, %v389
    %v391 = vpop.f32.mrb[0].mxu0
    %392 = vmatprep.mubr.bf16.mxu0 0
    %393 = vmatmul.mubr.bf16.gmra.mrb[0].mxu0 %v256
    %v394 = vpop.f32.mrb[0].mxu0
    %v395 = vadd.f32 %v89, %v394
    %v396 = vpop.f32.mrb[0].mxu0
    %v397 = vpop.f32.mrb[0].mxu0
    %v398 = vadd.f32 %v89, %v397
    %v399 = vpop.f32.mrb[0].mxu0
    %400 = vmatprep.mubr.bf16.mxu0 0
    %401 = vmatmul.mubr.bf16.gmra.mrb[0].mxu0 %v259
    %v402 = vpop.f32.mrb[0].mxu0
    %v403 = vadd.f32 %v89, %v402
    %v404 = vpop.f32.mrb[0].mxu0
    %v405 = vpop.f32.mrb[0].mxu0
    %v406 = vadd.f32 %v89, %v405
    %v407 = vpop.f32.mrb[0].mxu0
    %408 = vmatprep.mubr.bf16.mxu0 0
    %409 = vmatmul.mubr.bf16.gmra.mrb[0].mxu0 %v262
    %v410 = vpop.f32.mrb[0].mxu0
    %v411 = vadd.f32 %v89, %v410
    %v412 = vpop.f32.mrb[0].mxu0
    %v413 = vpop.f32.mrb[0].mxu0
    %v414 = vadd.f32 %v89, %v413
    %v415 = vpop.f32.mrb[0].mxu0
    %416 = vmatprep.mubr.bf16.mxu0 0
    %417 = vmatmul.mubr.bf16.gmra.mrb[0].mxu0 %v265
    %v418 = vpop.f32.mrb[0].mxu0
    %v419 = vadd.f32 %v89, %v418
    %v420 = vpop.f32.mrb[0].mxu0
    %v421 = vpop.f32.mrb[0].mxu0
    %v422 = vadd.f32 %v89, %v421
    %v423 = vpop.f32.mrb[0].mxu0
    %424 = vmatprep.mubr.bf16.mxu0 0
    %425 = vmatmul.mubr.bf16.gmra.mrb[0].mxu0 %v268
    %v426 = vpop.f32.mrb[0].mxu0
    %v427 = vadd.f32 %v89, %v426
    %v428 = vpop.f32.mrb[0].mxu0
    %v429 = vpop.f32.mrb[0].mxu0
    %v430 = vadd.f32 %v89, %v429
    %v431 = vpop.f32.mrb[0].mxu0
    %432 = vmatprep.mubr.bf16.mxu0 0
    %433 = vmatmul.mubr.bf16.gmra.mrb[0].mxu0 %v271
    %v434 = vpop.f32.mrb[0].mxu0
    %v435 = vadd.f32 %v89, %v434
    %v436 = vpop.f32.mrb[0].mxu0
    %v437 = vpop.f32.mrb[0].mxu0
    %v438 = vadd.f32 %v89, %v437
    %v439 = vpop.f32.mrb[0].mxu0
    %440 = vmatprep.mubr.bf16.mxu0 0
    %441 = vmatmul.mubr.bf16.gmra.mrb[0].mxu0 %v274
    %v442 = vpop.f32.mrb[0].mxu0
    %v443 = vadd.f32 %v89, %v442
    %v444 = vpop.f32.mrb[0].mxu0
    %v445 = vpop.f32.mrb[0].mxu0
    %v446 = vadd.f32 %v89, %v445
    %v447 = vpop.f32.mrb[0].mxu0
    %448 = vmatprep.mubr.bf16.mxu0 0
    %449 = vmatmul.mubr.bf16.gmra.mrb[0].mxu0 %v277
    %v450 = vpop.f32.mrb[0].mxu0
    %v451 = vadd.f32 %v89, %v450
    %v452 = vpop.f32.mrb[0].mxu0
    %v453 = vpop.f32.mrb[0].mxu0
    %v454 = vadd.f32 %v89, %v453
    %v455 = vpop.f32.mrb[0].mxu0
    %456 = vmatprep.mubr.bf16.mxu0 0
    %457 = vmatmul.mubr.bf16.gmra.mrb[0].mxu0 %v280
    %v458 = vpop.f32.mrb[0].mxu0
    %v459 = vadd.f32 %v89, %v458
    %v460 = vpop.f32.mrb[0].mxu0
    %v461 = vpop.f32.mrb[0].mxu0
    %v462 = vadd.f32 %v89, %v461
    %v463 = vpop.f32.mrb[0].mxu0
    %464 = vmatprep.mubr.bf16.mxu0 0
    %465 = vmatmul.mubr.bf16.gmra.mrb[0].mxu0 %v283
    %v466 = vpop.f32.mrb[0].mxu0
    %v467 = vadd.f32 %v89, %v466
    %v468 = vpop.f32.mrb[0].mxu0
    %v469 = vpop.f32.mrb[0].mxu0
    %v470 = vadd.f32 %v89, %v469
    %v471 = vpop.f32.mrb[0].mxu0
    %472 = vmatprep.mubr.bf16.mxu0 0
    %473 = vmatmul.mubr.bf16.gmra.mrb[0].mxu0 %v286
    %v474 = vpop.f32.mrb[0].mxu0
    %v475 = vadd.f32 %v89, %v474
    %v476 = vpop.f32.mrb[0].mxu0
    %v477 = vpop.f32.mrb[0].mxu0
    %v478 = vadd.f32 %v89, %v477
    %v479 = vpop.f32.mrb[0].mxu0
    %480 = vmatprep.mubr.bf16.mxu0 0
    %481 = vmatmul.mubr.bf16.gmra.mrb[0].mxu0 %v289
    %v482 = vpop.f32.mrb[0].mxu0
    %v483 = vadd.f32 %v89, %v482
    %v484 = vpop.f32.mrb[0].mxu0
    %v485 = vpop.f32.mrb[0].mxu0
    %v486 = vadd.f32 %v89, %v485
    %v487 = vpop.f32.mrb[0].mxu0
    %488 = vmatprep.mubr.bf16.mxu0 0
    %489 = vmatmul.mubr.bf16.gmra.mrb[0].mxu0 %v292
    %v490 = vpop.f32.mrb[0].mxu0
    %v491 = vadd.f32 %v89, %v490
    %v492 = vpop.f32.mrb[0].mxu0
    %v493 = vpop.f32.mrb[0].mxu0
    %v494 = vadd.f32 %v89, %v493
    %v495 = vpop.f32.mrb[0].mxu0
    %496 = vmatprep.mubr.bf16.mxu0 0
    %497 = vmatmul.mubr.bf16.gmra.mrb[0].mxu0 %v295
    %v498 = vpop.f32.mrb[0].mxu0
    %v499 = vadd.f32 %v89, %v498
    %v500 = vpop.f32.mrb[0].mxu0
    %v501 = vpop.f32.mrb[0].mxu0
    %v502 = vadd.f32 %v89, %v501
    %v503 = vpop.f32.mrb[0].mxu0
    %504 = vmatprep.mubr.bf16.mxu0 0
    %505 = vmatmul.mubr.bf16.gmra.mrb[0].mxu0 %v298
    %v506 = vpop.f32.mrb[0].mxu0
    %v507 = vadd.f32 %v89, %v506
    %v508 = vpop.f32.mrb[0].mxu0
    %v509 = vpop.f32.mrb[0].mxu0
    %v510 = vadd.f32 %v89, %v509
    %v511 = vpop.f32.mrb[0].mxu0
    %512 = vmatprep.mubr.bf16.mxu0 0
    %513 = vmatmul.mubr.bf16.gmra.mrb[0].mxu0 %v301
    %v514 = vpop.f32.mrb[0].mxu0
    %v515 = vadd.f32 %v89, %v514
    %v516 = vpop.f32.mrb[0].mxu0
    %v517 = vpop.f32.mrb[0].mxu0
    %v518 = vadd.f32 %v89, %v517
    %v519 = vpop.f32.mrb[0].mxu0
    %520 = vmatprep.mubr.bf16.mxu0 0
    %521 = vmatmul.mubr.bf16.gmra.mrb[0].mxu0 %v304
    %v522 = vpop.f32.mrb[0].mxu0
    %v523 = vadd.f32 %v89, %v522
    %v524 = vpop.f32.mrb[0].mxu0
    %v525 = vpop.f32.mrb[0].mxu0
    %v526 = vadd.f32 %v89, %v525
    %v527 = vpop.f32.mrb[0].mxu0
    %528 = vmatprep.mubr.bf16.mxu0 0
    %529 = vmatmul.mubr.bf16.gmra.mrb[0].mxu0 %v307
    %v530 = vpop.f32.mrb[0].mxu0
    %v531 = vadd.f32 %v89, %v530
    %v532 = vpop.f32.mrb[0].mxu0
    %v533 = vpop.f32.mrb[0].mxu0
    %v534 = vadd.f32 %v89, %v533
    %v535 = vpop.f32.mrb[0].mxu0
    %536 = vmatprep.mubr.bf16.mxu0 0
    %537 = vmatmul.mubr.bf16.gmra.mrb[0].mxu0 %v310
    %v538 = vpop.f32.mrb[0].mxu0
    %v539 = vadd.f32 %v89, %v538
    %v540 = vpop.f32.mrb[0].mxu0
    %v541 = vpop.f32.mrb[0].mxu0
    %v542 = vadd.f32 %v89, %v541
    %v543 = vpop.f32.mrb[0].mxu0
    %544 = vmatprep.mubr.bf16.mxu0 0
    %545 = vmatmul.mubr.bf16.gmra.mrb[0].mxu0 %v313
    %v546 = vpop.f32.mrb[0].mxu0
    %v547 = vadd.f32 %v89, %v546
    %v548 = vpop.f32.mrb[0].mxu0
    %v549 = vpop.f32.mrb[0].mxu0
    %v550 = vadd.f32 %v89, %v549
    %v551 = vpop.f32.mrb[0].mxu0
    %552 = vmatprep.mubr.bf16.mxu0 0
    %553 = vmatmul.mubr.bf16.gmra.mrb[0].mxu0 %v316
    %v554 = vpop.f32.mrb[0].mxu0
    %v555 = vadd.f32 %v89, %v554
    %v556 = vpop.f32.mrb[0].mxu0
    %v557 = vpop.f32.mrb[0].mxu0
    %v558 = vadd.f32 %v89, %v557
    %v559 = vpop.f32.mrb[0].mxu0
    %560 = vmatprep.mubr.bf16.mxu0 0
    %561 = vmatmul.mubr.bf16.gmra.mrb[0].mxu0 %v319
    %v562 = vpop.f32.mrb[0].mxu0
    %v563 = vadd.f32 %v89, %v562
    %v564 = vpop.f32.mrb[0].mxu0
    %v565 = vpop.f32.mrb[0].mxu0
    %v566 = vadd.f32 %v89, %v565
    %v567 = vpop.f32.mrb[0].mxu0
    %568 = vmatprep.mubr.bf16.mxu0 0
    %569 = vmatmul.mubr.bf16.gmra.mrb[0].mxu0 %v322
    %v570 = vpop.f32.mrb[0].mxu0
    %v571 = vadd.f32 %v89, %v570
    %v572 = vpop.f32.mrb[0].mxu0
    %v573 = vpop.f32.mrb[0].mxu0
    %v574 = vadd.f32 %v89, %v573
    %v575 = vpop.f32.mrb[0].mxu0
    %576 = vmatprep.mubr.bf16.mxu0 0
    %577 = vmatmul.mubr.bf16.gmra.mrb[0].mxu0 %v325
    %v578 = vpop.f32.mrb[0].mxu0
    %v579 = vadd.f32 %v89, %v578
    %v580 = vpop.f32.mrb[0].mxu0
    %v581 = vpop.f32.mrb[0].mxu0
    %v582 = vadd.f32 %v89, %v581
    %v583 = vpop.f32.mrb[0].mxu0
    %584 = vmatprep.mubr.bf16.mxu0 0
    %585 = vmatmul.mubr.bf16.gmra.mrb[0].mxu0 %v328
    %v586 = vpop.f32.mrb[0].mxu0
    %v587 = vadd.f32 %v89, %v586
    %v588 = vpop.f32.mrb[0].mxu0
    %v589 = vpop.f32.mrb[0].mxu0
    %v590 = vadd.f32 %v89, %v589
    %v591 = vpop.f32.mrb[0].mxu0
    %592 = vmatprep.mubr.bf16.mxu0 0
    %593 = vmatmul.mubr.bf16.gmra.mrb[0].mxu0 %v331
    %v594 = vpop.f32.mrb[0].mxu0
    %v595 = vadd.f32 %v89, %v594
    %v596 = vpop.f32.mrb[0].mxu0
    %v597 = vpop.f32.mrb[0].mxu0
    %v598 = vadd.f32 %v89, %v597
    %v599 = vpop.f32.mrb[0].mxu0
    %600 = vmatprep.mubr.bf16.mxu0 0
    %601 = vmatmul.mubr.bf16.gmra.mrb[0].mxu0 %v334
    %v602 = vpop.f32.mrb[0].mxu0
    %v603 = vadd.f32 %v89, %v602
    %v604 = vpop.f32.mrb[0].mxu0
    %v605 = vpop.f32.mrb[0].mxu0
    %v606 = vadd.f32 %v89, %v605
    %v607 = vpop.f32.mrb[0].mxu0
    %608 = vmatprep.mubr.bf16.mxu0 0
    %609 = vmatmul.mubr.bf16.gmra.mrb[0].mxu0 %v337
    %v610 = vpop.f32.mrb[0].mxu0
    %v611 = vadd.f32 %v89, %v610
    %v612 = vpop.f32.mrb[0].mxu0
    %v613 = vpop.f32.mrb[0].mxu0
    %v614 = vadd.f32 %v89, %v613
    %v615 = vpop.f32.mrb[0].mxu0
    %616 = vmatprep.mubr.bf16.mxu0 0
    %617 = vmatmul.mubr.bf16.gmra.mrb[0].mxu0 %v340
    %v618 = vpop.f32.mrb[0].mxu0
    %v619 = vadd.f32 %v89, %v618
    %v620 = vpop.f32.mrb[0].mxu0
    %v621 = vpop.f32.mrb[0].mxu0
    %v622 = vadd.f32 %v89, %v621
    %v623 = vpop.f32.mrb[0].mxu0
    %624 = vmatprep.mubr.bf16.mxu0 0
    %625 = vmatmul.mubr.bf16.gmra.mrb[0].mxu0 %v343
    %v626 = vpop.f32.mrb[0].mxu0
    %v627 = vadd.f32 %v89, %v626
    %v628 = vpop.f32.mrb[0].mxu0
    %v629 = vpop.f32.mrb[0].mxu0
    %v630 = vadd.f32 %v89, %v629
    %v631 = vpop.f32.mrb[0].mxu0
    %632 = vmatprep.mubr.bf16.mxu0 0
    %633 = vmatmul.mubr.bf16.gmra.mrb[0].mxu0 %v346
    %v634 = vpop.f32.mrb[0].mxu0
    %v635 = vadd.f32 %v89, %v634
    %v636 = vpop.f32.mrb[0].mxu0
    %v637 = vpop.f32.mrb[0].mxu0
    %v638 = vadd.f32 %v89, %v637
    %v639 = vpop.f32.mrb[0].mxu0
    %640 = vdwg.mxu0
    %v641 = vld [vmem:[%s3] sm:$0xf]
    %v642 = vld [vmem:[%s3 + $0x4] sm:$0xf]
    %v643 = vld [vmem:[%s3 + $0x8] sm:$0xf]
    %v644 = vld [vmem:[%s3 + $0xc] sm:$0xf]
    %v645 = vld [vmem:[%s3 + $0x10] sm:$0xf]
    %v646 = vld [vmem:[%s3 + $0x14] sm:$0xf]
    %v647 = vld [vmem:[%s3 + $0x18] sm:$0xf]
    %v648 = vld [vmem:[%s3 + $0x1c] sm:$0xf]
    %v649 = vld [vmem:[%s3 + $0x20] sm:$0xf]
    %v650 = vld [vmem:[%s3 + $0x24] sm:$0xf]
    %v651 = vld [vmem:[%s3 + $0x28] sm:$0xf]
    %v652 = vld [vmem:[%s3 + $0x2c] sm:$0xf]
    %v653 = vld [vmem:[%s3 + $0x30] sm:$0xf]
    %v654 = vld [vmem:[%s3 + $0x34] sm:$0xf]
    %v655 = vld [vmem:[%s3 + $0x38] sm:$0xf]
    %v656 = vld [vmem:[%s3 + $0x3c] sm:$0xf]
    %v657 = vld [vmem:[%s3 + $0x40] sm:$0xf]
    %v658 = vld [vmem:[%s3 + $0x44] sm:$0xf]
    %v659 = vld [vmem:[%s3 + $0x48] sm:$0xf]
    %v660 = vld [vmem:[%s3 + $0x4c] sm:$0xf]
    %v661 = vld [vmem:[%s3 + $0x50] sm:$0xf]
    %v662 = vld [vmem:[%s3 + $0x54] sm:$0xf]
    %v663 = vld [vmem:[%s3 + $0x58] sm:$0xf]
    %v664 = vld [vmem:[%s3 + $0x5c] sm:$0xf]
    %v665 = vld [vmem:[%s3 + $0x60] sm:$0xf]
    %v666 = vld [vmem:[%s3 + $0x64] sm:$0xf]
    %v667 = vld [vmem:[%s3 + $0x68] sm:$0xf]
    %v668 = vld [vmem:[%s3 + $0x6c] sm:$0xf]
    %v669 = vld [vmem:[%s3 + $0x70] sm:$0xf]
    %v670 = vld [vmem:[%s3 + $0x74] sm:$0xf]
    %v671 = vld [vmem:[%s3 + $0x78] sm:$0xf]
    %v672 = vld [vmem:[%s3 + $0x7c] sm:$0xf]
    %v673 = vld [vmem:[%s3 + $0x80] sm:$0xf]
    %v674 = vld [vmem:[%s3 + $0x84] sm:$0xf]
    %v675 = vld [vmem:[%s3 + $0x88] sm:$0xf]
    %v676 = vld [vmem:[%s3 + $0x8c] sm:$0xf]
    %v677 = vld [vmem:[%s3 + $0x90] sm:$0xf]
    %v678 = vld [vmem:[%s3 + $0x94] sm:$0xf]
    %v679 = vld [vmem:[%s3 + $0x98] sm:$0xf]
    %v680 = vld [vmem:[%s3 + $0x9c] sm:$0xf]
    %v681 = vld [vmem:[%s3 + $0xa0] sm:$0xf]
    %v682 = vld [vmem:[%s3 + $0xa4] sm:$0xf]
    %v683 = vld [vmem:[%s3 + $0xa8] sm:$0xf]
    %v684 = vld [vmem:[%s3 + $0xac] sm:$0xf]
    %v685 = vld [vmem:[%s3 + $0xb0] sm:$0xf]
    %v686 = vld [vmem:[%s3 + $0xb4] sm:$0xf]
    %v687 = vld [vmem:[%s3 + $0xb8] sm:$0xf]
    %v688 = vld [vmem:[%s3 + $0xbc] sm:$0xf]
    %v689 = vld [vmem:[%s3 + $0xc0] sm:$0xf]
    %v690 = vld [vmem:[%s3 + $0xc4] sm:$0xf]
    %v691 = vld [vmem:[%s3 + $0xc8] sm:$0xf]
    %v692 = vld [vmem:[%s3 + $0xcc] sm:$0xf]
    %v693 = vld [vmem:[%s3 + $0xd0] sm:$0xf]
    %v694 = vld [vmem:[%s3 + $0xd4] sm:$0xf]
    %v695 = vld [vmem:[%s3 + $0xd8] sm:$0xf]
    %v696 = vld [vmem:[%s3 + $0xdc] sm:$0xf]
    %v697 = vld [vmem:[%s3 + $0xe0] sm:$0xf]
    %v698 = vld [vmem:[%s3 + $0xe4] sm:$0xf]
    %v699 = vld [vmem:[%s3 + $0xe8] sm:$0xf]
    %v700 = vld [vmem:[%s3 + $0xec] sm:$0xf]
    %v701 = vld [vmem:[%s3 + $0xf0] sm:$0xf]
    %v702 = vld [vmem:[%s3 + $0xf4] sm:$0xf]
    %v703 = vld [vmem:[%s3 + $0xf8] sm:$0xf]
    %v704 = vld [vmem:[%s3 + $0xfc] sm:$0xf]
    %v705 = vunpack.c.l.bf16 %v641
    %v706 = vunpack.c.l.bf16 %v642
    %v707 = vunpack.c.l.bf16 %v643
    %v708 = vunpack.c.l.bf16 %v644
    %v709 = vunpack.c.l.bf16 %v645
    %v710 = vunpack.c.l.bf16 %v646
    %v711 = vunpack.c.l.bf16 %v647
    %v712 = vunpack.c.l.bf16 %v648
    %v713 = vunpack.c.l.bf16 %v649
    %v714 = vunpack.c.l.bf16 %v650
    %v715 = vunpack.c.l.bf16 %v651
    %v716 = vunpack.c.l.bf16 %v652
    %v717 = vunpack.c.l.bf16 %v653
    %v718 = vunpack.c.l.bf16 %v654
    %v719 = vunpack.c.l.bf16 %v655
    %v720 = vunpack.c.l.bf16 %v656
    %v721 = vunpack.c.l.bf16 %v657
    %v722 = vunpack.c.l.bf16 %v658
    %v723 = vunpack.c.l.bf16 %v659
    %v724 = vunpack.c.l.bf16 %v660
    %v725 = vunpack.c.l.bf16 %v661
    %v726 = vunpack.c.l.bf16 %v662
    %v727 = vunpack.c.l.bf16 %v663
    %v728 = vunpack.c.l.bf16 %v664
    %v729 = vunpack.c.l.bf16 %v665
    %v730 = vunpack.c.l.bf16 %v666
    %v731 = vunpack.c.l.bf16 %v667
    %v732 = vunpack.c.l.bf16 %v668
    %v733 = vunpack.c.l.bf16 %v669
    %v734 = vunpack.c.l.bf16 %v670
    %v735 = vunpack.c.l.bf16 %v671
    %v736 = vunpack.c.l.bf16 %v672
    %v737 = vunpack.c.l.bf16 %v673
    %v738 = vunpack.c.l.bf16 %v674
    %v739 = vunpack.c.l.bf16 %v675
    %v740 = vunpack.c.l.bf16 %v676
    %v741 = vunpack.c.l.bf16 %v677
    %v742 = vunpack.c.l.bf16 %v678
    %v743 = vunpack.c.l.bf16 %v679
    %v744 = vunpack.c.l.bf16 %v680
    %v745 = vunpack.c.l.bf16 %v681
    %v746 = vunpack.c.l.bf16 %v682
    %v747 = vunpack.c.l.bf16 %v683
    %v748 = vunpack.c.l.bf16 %v684
    %v749 = vunpack.c.l.bf16 %v685
    %v750 = vunpack.c.l.bf16 %v686
    %v751 = vunpack.c.l.bf16 %v687
    %v752 = vunpack.c.l.bf16 %v688
    %v753 = vunpack.c.l.bf16 %v689
    %v754 = vunpack.c.l.bf16 %v690
    %v755 = vunpack.c.l.bf16 %v691
    %v756 = vunpack.c.l.bf16 %v692
    %v757 = vunpack.c.l.bf16 %v693
    %v758 = vunpack.c.l.bf16 %v694
    %v759 = vunpack.c.l.bf16 %v695
    %v760 = vunpack.c.l.bf16 %v696
    %v761 = vunpack.c.l.bf16 %v697
    %v762 = vunpack.c.l.bf16 %v698
    %v763 = vunpack.c.l.bf16 %v699
    %v764 = vunpack.c.l.bf16 %v700
    %v765 = vunpack.c.l.bf16 %v701
    %v766 = vunpack.c.l.bf16 %v702
    %v767 = vunpack.c.l.bf16 %v703
    %v768 = vunpack.c.l.bf16 %v704
    %v769 = vadd.f32 %v387, %v705
    %v770 = vadd.f32 %v390, %v706
    %v771 = vadd.f32 %v395, %v707
    %v772 = vadd.f32 %v398, %v708
    %v773 = vadd.f32 %v403, %v709
    %v774 = vadd.f32 %v406, %v710
    %v775 = vadd.f32 %v411, %v711
    %v776 = vadd.f32 %v414, %v712
    %v777 = vadd.f32 %v419, %v713
    %v778 = vadd.f32 %v422, %v714
    %v779 = vadd.f32 %v427, %v715
    %v780 = vadd.f32 %v430, %v716
    %v781 = vadd.f32 %v435, %v717
    %v782 = vadd.f32 %v438, %v718
    %v783 = vadd.f32 %v443, %v719
    %v784 = vadd.f32 %v446, %v720
    %v785 = vadd.f32 %v451, %v721
    %v786 = vadd.f32 %v454, %v722
    %v787 = vadd.f32 %v459, %v723
    %v788 = vadd.f32 %v462, %v724
    %v789 = vadd.f32 %v467, %v725
    %v790 = vadd.f32 %v470, %v726
    %v791 = vadd.f32 %v475, %v727
    %v792 = vadd.f32 %v478, %v728
    %v793 = vadd.f32 %v483, %v729
    %v794 = vadd.f32 %v486, %v730
    %v795 = vadd.f32 %v491, %v731
    %v796 = vadd.f32 %v494, %v732
    %v797 = vadd.f32 %v499, %v733
    %v798 = vadd.f32 %v502, %v734
    %v799 = vadd.f32 %v507, %v735
    %v800 = vadd.f32 %v510, %v736
    %v801 = vadd.f32 %v515, %v737
    %v802 = vadd.f32 %v518, %v738
    %v803 = vadd.f32 %v523, %v739
    %v804 = vadd.f32 %v526, %v740
    %v805 = vadd.f32 %v531, %v741
    %v806 = vadd.f32 %v534, %v742
    %v807 = vadd.f32 %v539, %v743
    %v808 = vadd.f32 %v542, %v744
    %v809 = vadd.f32 %v547, %v745
    %v810 = vadd.f32 %v550, %v746
    %v811 = vadd.f32 %v555, %v747
    %v812 = vadd.f32 %v558, %v748
    %v813 = vadd.f32 %v563, %v749
    %v814 = vadd.f32 %v566, %v750
    %v815 = vadd.f32 %v571, %v751
    %v816 = vadd.f32 %v574, %v752
    %v817 = vadd.f32 %v579, %v753
    %v818 = vadd.f32 %v582, %v754
    %v819 = vadd.f32 %v587, %v755
    %v820 = vadd.f32 %v590, %v756
    %v821 = vadd.f32 %v595, %v757
    %v822 = vadd.f32 %v598, %v758
    %v823 = vadd.f32 %v603, %v759
    %v824 = vadd.f32 %v606, %v760
    %v825 = vadd.f32 %v611, %v761
    %v826 = vadd.f32 %v614, %v762
    %v827 = vadd.f32 %v619, %v763
    %v828 = vadd.f32 %v622, %v764
    %v829 = vadd.f32 %v627, %v765
    %v830 = vadd.f32 %v630, %v766
    %v831 = vadd.f32 %v635, %v767
    %v832 = vadd.f32 %v638, %v768
    %v833 = vmax.f32 %v769, 0.0
    %v834 = vmax.f32 %v770, 0.0
    %v835 = vmax.f32 %v771, 0.0
    %v836 = vmax.f32 %v772, 0.0
    %v837 = vmax.f32 %v773, 0.0
    %v838 = vmax.f32 %v774, 0.0
    %v839 = vmax.f32 %v775, 0.0
    %v840 = vmax.f32 %v776, 0.0
    %v841 = vmax.f32 %v777, 0.0
    %v842 = vmax.f32 %v778, 0.0
    %v843 = vmax.f32 %v779, 0.0
    %v844 = vmax.f32 %v780, 0.0
    %v845 = vmax.f32 %v781, 0.0
    %v846 = vmax.f32 %v782, 0.0
    %v847 = vmax.f32 %v783, 0.0
    %v848 = vmax.f32 %v784, 0.0
    %v849 = vmax.f32 %v785, 0.0
    %v850 = vmax.f32 %v786, 0.0
    %v851 = vmax.f32 %v787, 0.0
    %v852 = vmax.f32 %v788, 0.0
    %v853 = vmax.f32 %v789, 0.0
    %v854 = vmax.f32 %v790, 0.0
    %v855 = vmax.f32 %v791, 0.0
    %v856 = vmax.f32 %v792, 0.0
    %v857 = vmax.f32 %v793, 0.0
    %v858 = vmax.f32 %v794, 0.0
    %v859 = vmax.f32 %v795, 0.0
    %v860 = vmax.f32 %v796, 0.0
    %v861 = vmax.f32 %v797, 0.0
    %v862 = vmax.f32 %v798, 0.0
    %v863 = vmax.f32 %v799, 0.0
    %v864 = vmax.f32 %v800, 0.0
    %v865 = vmax.f32 %v801, 0.0
    %v866 = vmax.f32 %v802, 0.0
    %v867 = vmax.f32 %v803, 0.0
    %v868 = vmax.f32 %v804, 0.0
    %v869 = vmax.f32 %v805, 0.0
    %v870 = vmax.f32 %v806, 0.0
    %v871 = vmax.f32 %v807, 0.0
    %v872 = vmax.f32 %v808, 0.0
    %v873 = vmax.f32 %v809, 0.0
    %v874 = vmax.f32 %v810, 0.0
    %v875 = vmax.f32 %v811, 0.0
    %v876 = vmax.f32 %v812, 0.0
    %v877 = vmax.f32 %v813, 0.0
    %v878 = vmax.f32 %v814, 0.0
    %v879 = vmax.f32 %v815, 0.0
    %v880 = vmax.f32 %v816, 0.0
    %v881 = vmax.f32 %v817, 0.0
    %v882 = vmax.f32 %v818, 0.0
    %v883 = vmax.f32 %v819, 0.0
    %v884 = vmax.f32 %v820, 0.0
    %v885 = vmax.f32 %v821, 0.0
    %v886 = vmax.f32 %v822, 0.0
    %v887 = vmax.f32 %v823, 0.0
    %v888 = vmax.f32 %v824, 0.0
    %v889 = vmax.f32 %v825, 0.0
    %v890 = vmax.f32 %v826, 0.0
    %v891 = vmax.f32 %v827, 0.0
    %v892 = vmax.f32 %v828, 0.0
    %v893 = vmax.f32 %v829, 0.0
    %v894 = vmax.f32 %v830, 0.0
    %v895 = vmax.f32 %v831, 0.0
    %v896 = vmax.f32 %v832, 0.0
    %vm897 = vcmask 261120
    %898 = vst.msk [vmem:[#allocation2] sm:$0xff] %vm897, %v833
    %899 = vst.msk [vmem:[#allocation2 + $0x8] sm:$0xff] %vm897, %v834
    %900 = vst.msk [vmem:[#allocation2 + $0x10] sm:$0xff] %vm897, %v835
    %901 = vst.msk [vmem:[#allocation2 + $0x18] sm:$0xff] %vm897, %v836
    %902 = vst.msk [vmem:[#allocation2 + $0x20] sm:$0xff] %vm897, %v837
    %903 = vst.msk [vmem:[#allocation2 + $0x28] sm:$0xff] %vm897, %v838
    %904 = vst.msk [vmem:[#allocation2 + $0x30] sm:$0xff] %vm897, %v839
    %905 = vst.msk [vmem:[#allocation2 + $0x38] sm:$0xff] %vm897, %v840
    %906 = vst.msk [vmem:[#allocation2 + $0x40] sm:$0xff] %vm897, %v841
    %907 = vst.msk [vmem:[#allocation2 + $0x48] sm:$0xff] %vm897, %v842
    %908 = vst.msk [vmem:[#allocation2 + $0x50] sm:$0xff] %vm897, %v843
    %909 = vst.msk [vmem:[#allocation2 + $0x58] sm:$0xff] %vm897, %v844
    %910 = vst.msk [vmem:[#allocation2 + $0x60] sm:$0xff] %vm897, %v845
    %911 = vst.msk [vmem:[#allocation2 + $0x68] sm:$0xff] %vm897, %v846
    %912 = vst.msk [vmem:[#allocation2 + $0x70] sm:$0xff] %vm897, %v847
    %913 = vst.msk [vmem:[#allocation2 + $0x78] sm:$0xff] %vm897, %v848
    %914 = vst.msk [vmem:[#allocation2 + $0x80] sm:$0xff] %vm897, %v849
    %915 = vst.msk [vmem:[#allocation2 + $0x88] sm:$0xff] %vm897, %v850
    %916 = vst.msk [vmem:[#allocation2 + $0x90] sm:$0xff] %vm897, %v851
    %917 = vst.msk [vmem:[#allocation2 + $0x98] sm:$0xff] %vm897, %v852
    %918 = vst.msk [vmem:[#allocation2 + $0xa0] sm:$0xff] %vm897, %v853
    %919 = vst.msk [vmem:[#allocation2 + $0xa8] sm:$0xff] %vm897, %v854
    %920 = vst.msk [vmem:[#allocation2 + $0xb0] sm:$0xff] %vm897, %v855
    %921 = vst.msk [vmem:[#allocation2 + $0xb8] sm:$0xff] %vm897, %v856
    %922 = vst.msk [vmem:[#allocation2 + $0xc0] sm:$0xff] %vm897, %v857
    %923 = vst.msk [vmem:[#allocation2 + $0xc8] sm:$0xff] %vm897, %v858
    %924 = vst.msk [vmem:[#allocation2 + $0xd0] sm:$0xff] %vm897, %v859
    %925 = vst.msk [vmem:[#allocation2 + $0xd8] sm:$0xff] %vm897, %v860
    %926 = vst.msk [vmem:[#allocation2 + $0xe0] sm:$0xff] %vm897, %v861
    %927 = vst.msk [vmem:[#allocation2 + $0xe8] sm:$0xff] %vm897, %v862
    %928 = vst.msk [vmem:[#allocation2 + $0xf0] sm:$0xff] %vm897, %v863
    %929 = vst.msk [vmem:[#allocation2 + $0xf8] sm:$0xff] %vm897, %v864
    %930 = vst.msk [vmem:[#allocation2 + $0x100] sm:$0xff] %vm897, %v865
    %931 = vst.msk [vmem:[#allocation2 + $0x108] sm:$0xff] %vm897, %v866
    %932 = vst.msk [vmem:[#allocation2 + $0x110] sm:$0xff] %vm897, %v867
    %933 = vst.msk [vmem:[#allocation2 + $0x118] sm:$0xff] %vm897, %v868
    %934 = vst.msk [vmem:[#allocation2 + $0x120] sm:$0xff] %vm897, %v869
    %935 = vst.msk [vmem:[#allocation2 + $0x128] sm:$0xff] %vm897, %v870
    %936 = vst.msk [vmem:[#allocation2 + $0x130] sm:$0xff] %vm897, %v871
    %937 = vst.msk [vmem:[#allocation2 + $0x138] sm:$0xff] %vm897, %v872
    %938 = vst.msk [vmem:[#allocation2 + $0x140] sm:$0xff] %vm897, %v873
    %939 = vst.msk [vmem:[#allocation2 + $0x148] sm:$0xff] %vm897, %v874
    %940 = vst.msk [vmem:[#allocation2 + $0x150] sm:$0xff] %vm897, %v875
    %941 = vst.msk [vmem:[#allocation2 + $0x158] sm:$0xff] %vm897, %v876
    %942 = vst.msk [vmem:[#allocation2 + $0x160] sm:$0xff] %vm897, %v877
    %943 = vst.msk [vmem:[#allocation2 + $0x168] sm:$0xff] %vm897, %v878
    %944 = vst.msk [vmem:[#allocation2 + $0x170] sm:$0xff] %vm897, %v879
    %945 = vst.msk [vmem:[#allocation2 + $0x178] sm:$0xff] %vm897, %v880
    %946 = vst.msk [vmem:[#allocation2 + $0x180] sm:$0xff] %vm897, %v881
    %947 = vst.msk [vmem:[#allocation2 + $0x188] sm:$0xff] %vm897, %v882
    %948 = vst.msk [vmem:[#allocation2 + $0x190] sm:$0xff] %vm897, %v883
    %949 = vst.msk [vmem:[#allocation2 + $0x198] sm:$0xff] %vm897, %v884
    %950 = vst.msk [vmem:[#allocation2 + $0x1a0] sm:$0xff] %vm897, %v885
    %951 = vst.msk [vmem:[#allocation2 + $0x1a8] sm:$0xff] %vm897, %v886
    %952 = vst.msk [vmem:[#allocation2 + $0x1b0] sm:$0xff] %vm897, %v887
    %953 = vst.msk [vmem:[#allocation2 + $0x1b8] sm:$0xff] %vm897, %v888
    %954 = vst.msk [vmem:[#allocation2 + $0x1c0] sm:$0xff] %vm897, %v889
    %955 = vst.msk [vmem:[#allocation2 + $0x1c8] sm:$0xff] %vm897, %v890
    %956 = vst.msk [vmem:[#allocation2 + $0x1d0] sm:$0xff] %vm897, %v891
    %957 = vst.msk [vmem:[#allocation2 + $0x1d8] sm:$0xff] %vm897, %v892
    %958 = vst.msk [vmem:[#allocation2 + $0x1e0] sm:$0xff] %vm897, %v893
    %959 = vst.msk [vmem:[#allocation2 + $0x1e8] sm:$0xff] %vm897, %v894
    %960 = vst.msk [vmem:[#allocation2 + $0x1f0] sm:$0xff] %vm897, %v895
    %961 = vst.msk [vmem:[#allocation2 + $0x1f8] sm:$0xff] %vm897, %v896
    // Predicated region
    $region18: #{_lambda_.5} parent=1 // pred_check
      _
    $region19: #{_lambda_.5} parent=1 // pred_check_branch
      %963 = sbr.rel (0) target = $region21
    $region20: #{_lambda_.5} parent=1 // pred_region
      %s965 = ssub.s32 8192, 8192
      %966 = vsyncadd [#allocation3], %s965
      %s967 = sshll.u32 [#allocation2], 4
      %s968 = int_to_ptr.vmem [resolvable:$true] %s967
      %973 = dma.vmem_to_hbm [thread:$0]  %s968, 8192, %s4, [#allocation3], 128, 128, 8
    $region21: #{_lambda_.5} parent=1 // pred_fallthru
      _
    // Predicated region
    $region22: #{_lambda_.5} parent=1 // pred_check
      _
    $region23: #{_lambda_.5} parent=1 // pred_check_branch
      %975 = sbr.rel (0) target = $region25
    $region24: #{_lambda_.5} parent=1 // pred_region
      %976 = dma.done [#allocation3], 8192
    $region25: #{_lambda_.5} parent=1 // pred_fallthru
      _
    %977 = vsyncpa [#allocation3], 1

</llo_original>
